<compile_context>
chip_gen: v7x
topology: tpu7x:2x2x1
jax: 0.10.0
libtpu: 0.0.40
codegen_flags: <defaults>
</compile_context>

<pallas_src>
import jax
import jax.numpy as jnp
from jax.experimental import pallas as pl
from jax.experimental.pallas import tpu as pltpu


def _relu6(x):
    return jnp.clip(x, 0.0, 6.0)


# ---------------------------------------------------------------------------
# Fused kernel: (1x1 conv + ReLU6) -> (depthwise 3x3 + ReLU6) -> (1x1 conv)
# with all BatchNorms pre-folded into the weights/biases.
#
#   xc_ref : (1, TH, W, C)      row tile of the input (NHWC)
#   xt_ref : (1, 1, 1, W, C)    input row just above the tile (zeros at top)
#   xb_ref : (1, 1, 1, W, C)    input row just below the tile (zeros at bottom)
#   w1_ref : (C, Ch)            fc1 weight, BN1 scale folded in
#   b1_ref : (1, Ch)            fc1 bias (= BN1 shift)
#   wdw_ref: (9, Ch)            depthwise taps (row = kh*3+kw), BN2 scale folded
#   bdw_ref: (1, Ch)            depthwise bias folded with BN2
#   w3_ref : (Ch, Cout)         fc3 weight, BN3 scale folded in
#   b3_ref : (1, Cout)          fc3 bias (= BN3 shift)
#   o_ref  : (1, TH, W, Cout)
#   y1_scr : (TH+2, W+2, Ch)    VMEM scratch: zero-padded fc1 activation
# ---------------------------------------------------------------------------
def mlp_fused_kernel(xc_ref, xt_ref, xb_ref,
                     w1_ref, b1_ref, wdw_ref, bdw_ref, w3_ref, b3_ref,
                     o_ref, y1_scr):
    _, TH, W, C = xc_ref.shape
    Ch = w1_ref.shape[1]
    Cout = o_ref.shape[3]
    i = pl.program_id(1)
    n = pl.num_programs(1)

    w1 = w1_ref[...]
    b1 = b1_ref[...]

    # ---- fc1 on the main tile rows (MXU), written straight into the scratch
    xc = xc_ref[...].reshape(TH * W, C)
    y1 = _relu6(jnp.dot(xc, w1, preferred_element_type=jnp.float32) + b1)
    y1_scr[1:TH + 1, 1:W + 1, :] = y1.reshape(TH, W, Ch)

    # ---- fc1 on the two halo rows; rows outside the image must be exactly 0
    #      (the depthwise conv zero-pads its *input*), so mask the 2 tiny rows.
    xh = jnp.concatenate(
        [xt_ref[...].reshape(W, C), xb_ref[...].reshape(W, C)], axis=0)
    yh = _relu6(jnp.dot(xh, w1, preferred_element_type=jnp.float32) + b1)
    yh = yh.reshape(2, W, Ch)
    keep_top = jnp.where(i > 0, 1.0, 0.0).astype(jnp.float32)
    keep_bot = jnp.where(i < n - 1, 1.0, 0.0).astype(jnp.float32)
    y1_scr[0:1, 1:W + 1, :] = yh[0:1] * keep_top
    y1_scr[TH + 1:TH + 2, 1:W + 1, :] = yh[1:2] * keep_bot

    # ---- zero the two W-pad columns (tiny; keeps the whole scratch defined
    #      every step, independent of megacore scheduling)
    zcol = jnp.zeros((TH + 2, 1, Ch), jnp.float32)
    y1_scr[0:TH + 2, 0:1, :] = zcol
    y1_scr[0:TH + 2, W + 1:W + 2, :] = zcol

    # ---- fc2: depthwise 3x3 (bias + BN2 folded) + ReLU6 on the VPU.
    #      Accumulator initialised with the first tap; taps read shifted
    #      slices directly from the padded scratch ref (no padded copy).
    wdw = wdw_ref[...]                                         # (9, Ch)
    acc = y1_scr[0:TH, 0:W, :] * wdw[0].reshape(1, 1, Ch)
    for k in range(1, 9):
        kh, kw = divmod(k, 3)
        acc = acc + y1_scr[kh:kh + TH, kw:kw + W, :] * wdw[k].reshape(1, 1, Ch)
    h2 = _relu6(acc + bdw_ref[...].reshape(1, 1, Ch))          # (TH, W, Ch)

    # ---- fc3: 1x1 conv (BN3 folded) on the MXU
    h2m = h2.reshape(TH * W, Ch).astype(w3_ref.dtype)
    z = jnp.dot(h2m, w3_ref[...], preferred_element_type=jnp.float32)
    z = z + b3_ref[...]
    o_ref[...] = z.reshape(1, TH, W, Cout).astype(o_ref.dtype)


# ---------------------------------------------------------------------------
# VMEM working-set estimate (lane/sublane padded) and tile_h selection.
# ---------------------------------------------------------------------------
def _padded_bytes(shape, dtype_bytes=4):
    shape = tuple(shape)
    if len(shape) == 1:
        shape = (1,) + shape
    lead = 1
    for d in shape[:-2]:
        lead *= d
    sub = -(-shape[-2] // 8) * 8
    lane = -(-shape[-1] // 128) * 128
    return lead * sub * lane * dtype_bytes


def _pick_tile_h(H, W, C, Ch, Cout, budget_bytes):
    best = 1
    for th in range(1, H + 1):
        if H % th != 0:
            continue
        ws = (_padded_bytes((th + 2, W + 2, Ch))        # padded fc1 scratch
              + 2 * _padded_bytes((th, W, C))           # double-buffered input
              + 4 * _padded_bytes((1, W, C))            # halo rows (x2 buffers)
              + 2 * _padded_bytes((th, W, Cout))        # double-buffered output
              + 3 * _padded_bytes((th, W, Ch)))         # live y1/acc/h2 vregs
        if ws <= budget_bytes:
            best = max(best, th)
    return best


# ---------------------------------------------------------------------------
# Wrapper: Mlp forward (NCHW in, NCHW out, like PyTorch).
# ---------------------------------------------------------------------------
def mlp_forward(x_nchw, p, eps=1e-5, tile_h=None,
                vmem_budget_bytes=24 << 20, mxu_dtype=None):
    B, C, H, W = x_nchw.shape
    Ch = p["w1"].shape[0]
    Cout = p["w3"].shape[0]

    # Largest divisor of H whose working set fits the VMEM budget (no silent
    # "whole image in one tile" fallback).
    if tile_h is None or H % tile_h != 0:
        tile_h = _pick_tile_h(H, W, C, Ch, Cout, vmem_budget_bytes)
    # Keep >= 2 grid steps when B == 1 so v7x megacore has work for both TCs.
    if B == 1 and H // tile_h < 2:
        for d in range(tile_h - 1, 0, -1):
            if H % d == 0 and H // d >= 2:
                tile_h = d
                break
    n_t = H // tile_h

    # ---- fold the three inference-mode BatchNorms into weights/biases ----
    s1 = p["g1"] / jnp.sqrt(p["v1"] + eps); t1 = p["b1"] - p["m1"] * s1
    s2 = p["g2"] / jnp.sqrt(p["v2"] + eps); t2 = p["b2"] - p["m2"] * s2
    s3 = p["g3"] / jnp.sqrt(p["v3"] + eps); t3 = p["b3"] - p["m3"] * s3

    w1_mat = jnp.transpose(p["w1"][:, :, 0, 0], (1, 0)) * s1[None, :]   # (C, Ch)
    b1_vec = t1[None, :]                                                # (1, Ch)
    w_dw = (jnp.transpose(p["w_dw"][:, 0], (1, 2, 0)) * s2).reshape(9, Ch)
    bdw_vec = (p["bias_dw"] * s2 + t2)[None, :]                         # (1, Ch)
    w3_mat = jnp.transpose(p["w3"][:, :, 0, 0], (1, 0)) * s3[None, :]   # (Ch, Cout)
    b3_vec = t3[None, :]                                                # (1, Cout)

    # ---- NCHW -> NHWC (channels on TPU lanes) ----
    x = jnp.transpose(x_nchw, (0, 2, 3, 1))                             # (B,H,W,C)

    # Optional bf16 MXU operands (v6e/v7x); accumulation stays f32 via
    # preferred_element_type, depthwise stage stays f32 (v5e-safe).
    if mxu_dtype is not None:
        x = x.astype(mxu_dtype)
        w1_mat = w1_mat.astype(mxu_dtype)
        w3_mat = w3_mat.astype(mxu_dtype)

    # ---- tiny pre-gathered halo rows (2 rows per tile; zeros at image edges).
    # Their HBM/DMA cost scales as 2/tile_h, so it shrinks with larger tiles.
    zrow = jnp.zeros((B, 1, W, C), x.dtype)
    if n_t > 1:
        tops = x[:, tile_h - 1:H - 1:tile_h]                            # (B,n_t-1,W,C)
        bots = x[:, tile_h::tile_h]                                     # (B,n_t-1,W,C)
        x_top = jnp.concatenate([zrow, tops], axis=1)
        x_bot = jnp.concatenate([bots, zrow], axis=1)
    else:
        x_top, x_bot = zrow, zrow
    x_top = x_top[:, :, None]                                           # (B,n_t,1,W,C)
    x_bot = x_bot[:, :, None]                                           # (B,n_t,1,W,C)

    out_nhwc = pl.pallas_call(
        mlp_fused_kernel,
        out_shape=jax.ShapeDtypeStruct((B, H, W, Cout), jnp.float32),
        grid=(B, n_t),
        in_specs=[
            pl.BlockSpec((1, tile_h, W, C), lambda b, i: (b, i, 0, 0)),
            pl.BlockSpec((1, 1, 1, W, C), lambda b, i: (b, i, 0, 0, 0)),
            pl.BlockSpec((1, 1, 1, W, C), lambda b, i: (b, i, 0, 0, 0)),
            pl.BlockSpec((C, Ch), lambda b, i: (0, 0)),
            pl.BlockSpec((1, Ch), lambda b, i: (0, 0)),
            pl.BlockSpec((9, Ch), lambda b, i: (0, 0)),
            pl.BlockSpec((1, Ch), lambda b, i: (0, 0)),
            pl.BlockSpec((Ch, Cout), lambda b, i: (0, 0)),
            pl.BlockSpec((1, Cout), lambda b, i: (0, 0)),
        ],
        out_specs=pl.BlockSpec((1, tile_h, W, Cout), lambda b, i: (b, i, 0, 0)),
        scratch_shapes=[pltpu.VMEM((tile_h + 2, W + 2, Ch), jnp.float32)],
        compiler_params=pltpu.CompilerParams(
            dimension_semantics=("parallel", "parallel"),
            vmem_limit_bytes=48 * 1024 * 1024),
    )(x, x_top, x_bot, w1_mat, b1_vec, w_dw, bdw_vec, w3_mat, b3_vec)

    return jnp.transpose(out_nhwc, (0, 3, 1, 2))                        # NCHW


# ---------------------------------------------------------------------------
# Pure-JAX reference (mirrors the PyTorch ops) for a correctness check.
# ---------------------------------------------------------------------------
def ref_forward(x_nchw, p, eps=1e-5):
    Ch = p["w1"].shape[0]
    hp = jax.lax.Precision.HIGHEST
    s1 = p["g1"] / jnp.sqrt(p["v1"] + eps); t1 = p["b1"] - p["m1"] * s1
    s2 = p["g2"] / jnp.sqrt(p["v2"] + eps); t2 = p["b2"] - p["m2"] * s2
    s3 = p["g3"] / jnp.sqrt(p["v3"] + eps); t3 = p["b3"] - p["m3"] * s3

    y = jax.lax.conv_general_dilated(
        x_nchw, p["w1"], (1, 1), "VALID",
        dimension_numbers=("NCHW", "OIHW", "NCHW"), precision=hp)
    y = jnp.clip(y * s1[None, :, None, None] + t1[None, :, None, None], 0.0, 6.0)

    z = jax.lax.conv_general_dilated(
        y, p["w_dw"], (1, 1), ((1, 1), (1, 1)),
        dimension_numbers=("NCHW", "OIHW", "NCHW"),
        feature_group_count=Ch, precision=hp)
    z = z + p["bias_dw"][None, :, None, None]
    z = jnp.clip(z * s2[None, :, None, None] + t2[None, :, None, None], 0.0, 6.0)

    o = jax.lax.conv_general_dilated(
        z, p["w3"], (1, 1), "VALID",
        dimension_numbers=("NCHW", "OIHW", "NCHW"), precision=hp)
    return o * s3[None, :, None, None] + t3[None, :, None, None]


if __name__ == "__main__":
    in_f, hid_f, out_f = 8, 32, 8
    B, H, W = 2, 16, 16

    key = jax.random.PRNGKey(0)
    ks = jax.random.split(key, 17)

    x = jax.random.normal(ks[0], (B, in_f, H, W), jnp.float32)

    params = {
        # fc1: Conv2d(in, hidden, 1, bias=False) + BN(hidden) + ReLU6
        "w1": 0.2 * jax.random.normal(ks[1], (hid_f, in_f, 1, 1), jnp.float32),
        "g1": 1.0 + 0.1 * jax.random.normal(ks[2], (hid_f,), jnp.float32),
        "b1": 0.1 * jax.random.normal(ks[3], (hid_f,), jnp.float32),
        "m1": 0.1 * jax.random.normal(ks[4], (hid_f,), jnp.float32),
        "v1": 1.0 + 0.05 * jnp.abs(jax.random.normal(ks[5], (hid_f,), jnp.float32)),
        # fc2: depthwise Conv2d(hidden, hidden, 3, pad=1, groups=hidden) + BN + ReLU6
        "w_dw": 0.2 * jax.random.normal(ks[6], (hid_f, 1, 3, 3), jnp.float32),
        "bias_dw": 0.1 * jax.random.normal(ks[7], (hid_f,), jnp.float32),
        "g2": 1.0 + 0.1 * jax.random.normal(ks[8], (hid_f,), jnp.float32),
        "b2": 0.1 * jax.random.normal(ks[9], (hid_f,), jnp.float32),
        "m2": 0.1 * jax.random.normal(ks[10], (hid_f,), jnp.float32),
        "v2": 1.0 + 0.05 * jnp.abs(jax.random.normal(ks[11], (hid_f,), jnp.float32)),
        # fc3: Conv2d(hidden, out, 1, bias=False) + BN(out)
        "w3": 0.2 * jax.random.normal(ks[12], (out_f, hid_f, 1, 1), jnp.float32),
        "g3": 1.0 + 0.1 * jax.random.normal(ks[13], (out_f,), jnp.float32),
        "b3": 0.1 * jax.random.normal(ks[14], (out_f,), jnp.float32),
        "m3": 0.1 * jax.random.normal(ks[15], (out_f,), jnp.float32),
        "v3": 1.0 + 0.05 * jnp.abs(jax.random.normal(ks[16], (out_f,), jnp.float32)),
    }

    out = jax.block_until_ready(mlp_forward(x, params))
    ref = jax.block_until_ready(ref_forward(x, params))

    assert out.shape == (B, out_f, H, W), out.shape
    max_err = float(jnp.max(jnp.abs(out - ref)))
    assert jnp.allclose(out, ref, atol=2e-3, rtol=2e-3), max_err

    print("KERNEL_OK")
</pallas_src>

<mosaic_0001>
module attributes {stable_mosaic.version = 11 : i64} {
  func.func @mlp_fused_kernel(%arg0: i32, %arg1: i32, %arg2: memref<1x16x16x8xf32, #tpu.memory_space<vmem>>, %arg3: memref<1x1x1x16x8xf32, #tpu.memory_space<vmem>>, %arg4: memref<1x1x1x16x8xf32, #tpu.memory_space<vmem>>, %arg5: memref<8x32xf32, #tpu.memory_space<vmem>>, %arg6: memref<1x32xf32, #tpu.memory_space<vmem>>, %arg7: memref<9x32xf32, #tpu.memory_space<vmem>>, %arg8: memref<1x32xf32, #tpu.memory_space<vmem>>, %arg9: memref<32x8xf32, #tpu.memory_space<vmem>>, %arg10: memref<1x8xf32, #tpu.memory_space<vmem>>, %arg11: memref<1x16x16x8xf32, #tpu.memory_space<vmem>>, %arg12: memref<18x18x32xf32, #tpu.memory_space<vmem>>) attributes {dimension_semantics = [#tpu.dimension_semantics<parallel>, #tpu.dimension_semantics<parallel>], iteration_bounds = array<i64: 2, 1>, scalar_prefetch = 0 : i64, scratch_operands = 1 : i64, tpu.core_type = #tpu.core_type<tc>, window_params = [{transform_indices = @transform_0, window_bounds = array<i64: 1, 16, 16, 8>}, {transform_indices = @transform_1, window_bounds = array<i64: 1, 1, 1, 16, 8>}, {transform_indices = @transform_2, window_bounds = array<i64: 1, 1, 1, 16, 8>}, {pipeline_mode = #tpu.pipeline_mode<synchronous>, transform_indices = @transform_3, window_bounds = array<i64: 8, 32>}, {pipeline_mode = #tpu.pipeline_mode<synchronous>, transform_indices = @transform_4, window_bounds = array<i64: 1, 32>}, {pipeline_mode = #tpu.pipeline_mode<synchronous>, transform_indices = @transform_5, window_bounds = array<i64: 9, 32>}, {pipeline_mode = #tpu.pipeline_mode<synchronous>, transform_indices = @transform_6, window_bounds = array<i64: 1, 32>}, {pipeline_mode = #tpu.pipeline_mode<synchronous>, transform_indices = @transform_7, window_bounds = array<i64: 32, 8>}, {pipeline_mode = #tpu.pipeline_mode<synchronous>, transform_indices = @transform_8, window_bounds = array<i64: 1, 8>}, {transform_indices = @transform_9, window_bounds = array<i64: 1, 16, 16, 8>}]} {
    %c0 = arith.constant 0 : index
    %c0_0 = arith.constant 0 : index
    %0 = vector.load %arg5[%c0, %c0_0] : memref<8x32xf32, #tpu.memory_space<vmem>>, vector<8x32xf32>
    %c0_1 = arith.constant 0 : index
    %c0_2 = arith.constant 0 : index
    %1 = vector.load %arg6[%c0_1, %c0_2] : memref<1x32xf32, #tpu.memory_space<vmem>>, vector<1x32xf32>
    %c0_3 = arith.constant 0 : index
    %c0_4 = arith.constant 0 : index
    %c0_5 = arith.constant 0 : index
    %c0_6 = arith.constant 0 : index
    %2 = vector.load %arg2[%c0_3, %c0_4, %c0_5, %c0_6] : memref<1x16x16x8xf32, #tpu.memory_space<vmem>>, vector<1x16x16x8xf32>
    %3 = vector.shape_cast %2 : vector<1x16x16x8xf32> to vector<256x8xf32>
    %cst = arith.constant dense<0.000000e+00> : vector<256x32xf32>
    %4 = tpu.matmul %3, %0, %cst {dimension_numbers = #tpu.dot_dimension_numbers<[1], [0], [0], [1], [0, 0, 1, 1], [], []>} : vector<256x8xf32>, vector<8x32xf32>, vector<256x32xf32> -> vector<256x32xf32>
    %5 = vector.broadcast %1 : vector<1x32xf32> to vector<256x32xf32>
    %6 = arith.addf %4, %5 : vector<256x32xf32>
    %cst_7 = arith.constant 0.000000e+00 : f32
    %cst_8 = arith.constant 6.000000e+00 : f32
    %7 = vector.broadcast %cst_7 : f32 to vector<256x32xf32>
    %8 = arith.maximumf %7, %6 : vector<256x32xf32>
    %9 = vector.broadcast %cst_8 : f32 to vector<256x32xf32>
    %10 = arith.minimumf %9, %8 : vector<256x32xf32>
    %11 = vector.shape_cast %10 : vector<256x32xf32> to vector<16x16x32xf32>
    %c1 = arith.constant 1 : index
    %c1_9 = arith.constant 1 : index
    %c0_10 = arith.constant 0 : index
    %12 = vector.load %arg12[%c1, %c1_9, %c0_10] : memref<18x18x32xf32, #tpu.memory_space<vmem>>, vector<16x16x32xf32>
    tpu.vector_store %arg12[%c1, %c1_9, %c0_10], %11 {strides = array<i32>} : memref<18x18x32xf32, #tpu.memory_space<vmem>>, vector<16x16x32xf32>,
    %c0_11 = arith.constant 0 : index
    %c0_12 = arith.constant 0 : index
    %c0_13 = arith.constant 0 : index
    %c0_14 = arith.constant 0 : index
    %c0_15 = arith.constant 0 : index
    %13 = vector.load %arg3[%c0_11, %c0_12, %c0_13, %c0_14, %c0_15] : memref<1x1x1x16x8xf32, #tpu.memory_space<vmem>>, vector<1x1x1x16x8xf32>
    %14 = vector.shape_cast %13 : vector<1x1x1x16x8xf32> to vector<16x8xf32>
    %c0_16 = arith.constant 0 : index
    %c0_17 = arith.constant 0 : index
    %c0_18 = arith.constant 0 : index
    %c0_19 = arith.constant 0 : index
    %c0_20 = arith.constant 0 : index
    %15 = vector.load %arg4[%c0_16, %c0_17, %c0_18, %c0_19, %c0_20] : memref<1x1x1x16x8xf32, #tpu.memory_space<vmem>>, vector<1x1x1x16x8xf32>
    %16 = vector.shape_cast %15 : vector<1x1x1x16x8xf32> to vector<16x8xf32>
    %17 = tpu.concatenate %14, %16 in 0 : vector<16x8xf32>, vector<16x8xf32> -> vector<32x8xf32>
    %cst_21 = arith.constant dense<0.000000e+00> : vector<32x32xf32>
    %18 = tpu.matmul %17, %0, %cst_21 {dimension_numbers = #tpu.dot_dimension_numbers<[1], [0], [0], [1], [0, 0, 1, 1], [], []>} : vector<32x8xf32>, vector<8x32xf32>, vector<32x32xf32> -> vector<32x32xf32>
    %19 = vector.broadcast %1 : vector<1x32xf32> to vector<32x32xf32>
    %20 = arith.addf %18, %19 : vector<32x32xf32>
    %cst_22 = arith.constant 0.000000e+00 : f32
    %cst_23 = arith.constant 6.000000e+00 : f32
    %21 = vector.broadcast %cst_22 : f32 to vector<32x32xf32>
    %22 = arith.maximumf %21, %20 : vector<32x32xf32>
    %23 = vector.broadcast %cst_23 : f32 to vector<32x32xf32>
    %24 = arith.minimumf %23, %22 : vector<32x32xf32>
    %25 = vector.shape_cast %24 : vector<32x32xf32> to vector<2x16x32xf32>
    %c0_i32 = arith.constant 0 : i32
    %26 = arith.cmpi sgt, %arg1, %c0_i32 : i32
    %cst_24 = arith.constant 1.000000e+00 : f32
    %cst_25 = arith.constant 0.000000e+00 : f32
    %27 = arith.select %26, %cst_24, %cst_25 : f32
    %c0_i32_26 = arith.constant 0 : i32
    %28 = arith.cmpi slt, %arg1, %c0_i32_26 : i32
    %cst_27 = arith.constant 1.000000e+00 : f32
    %cst_28 = arith.constant 0.000000e+00 : f32
    %29 = arith.select %28, %cst_27, %cst_28 : f32
    %30 = vector.extract_strided_slice %25 {offsets = [0, 0, 0], sizes = [1, 16, 32], strides = [1, 1, 1]} : vector<2x16x32xf32> to vector<1x16x32xf32>
    %31 = vector.broadcast %27 : f32 to vector<1x16x32xf32>
    %32 = arith.mulf %30, %31 : vector<1x16x32xf32>
    %c0_29 = arith.constant 0 : index
    %c1_30 = arith.constant 1 : index
    %c0_31 = arith.constant 0 : index
    %33 = vector.load %arg12[%c0_29, %c1_30, %c0_31] : memref<18x18x32xf32, #tpu.memory_space<vmem>>, vector<1x16x32xf32>
    tpu.vector_store %arg12[%c0_29, %c1_30, %c0_31], %32 {strides = array<i32>} : memref<18x18x32xf32, #tpu.memory_space<vmem>>, vector<1x16x32xf32>,
    %34 = vector.extract_strided_slice %25 {offsets = [1, 0, 0], sizes = [1, 16, 32], strides = [1, 1, 1]} : vector<2x16x32xf32> to vector<1x16x32xf32>
    %35 = vector.broadcast %29 : f32 to vector<1x16x32xf32>
    %36 = arith.mulf %34, %35 : vector<1x16x32xf32>
    %c17 = arith.constant 17 : index
    %c1_32 = arith.constant 1 : index
    %c0_33 = arith.constant 0 : index
    %37 = vector.load %arg12[%c17, %c1_32, %c0_33] : memref<18x18x32xf32, #tpu.memory_space<vmem>>, vector<1x16x32xf32>
    tpu.vector_store %arg12[%c17, %c1_32, %c0_33], %36 {strides = array<i32>} : memref<18x18x32xf32, #tpu.memory_space<vmem>>, vector<1x16x32xf32>,
    %cst_34 = arith.constant 0.000000e+00 : f32
    %38 = vector.broadcast %cst_34 : f32 to vector<18x1x32xf32>
    %c0_35 = arith.constant 0 : index
    %c0_36 = arith.constant 0 : index
    %c0_37 = arith.constant 0 : index
    %39 = vector.load %arg12[%c0_35, %c0_36, %c0_37] : memref<18x18x32xf32, #tpu.memory_space<vmem>>, vector<18x1x32xf32>
    tpu.vector_store %arg12[%c0_35, %c0_36, %c0_37], %38 {strides = array<i32>} : memref<18x18x32xf32, #tpu.memory_space<vmem>>, vector<18x1x32xf32>,
    %c0_38 = arith.constant 0 : index
    %c17_39 = arith.constant 17 : index
    %c0_40 = arith.constant 0 : index
    %40 = vector.load %arg12[%c0_38, %c17_39, %c0_40] : memref<18x18x32xf32, #tpu.memory_space<vmem>>, vector<18x1x32xf32>
    tpu.vector_store %arg12[%c0_38, %c17_39, %c0_40], %38 {strides = array<i32>} : memref<18x18x32xf32, #tpu.memory_space<vmem>>, vector<18x1x32xf32>,
    %c0_41 = arith.constant 0 : index
    %c0_42 = arith.constant 0 : index
    %41 = vector.load %arg7[%c0_41, %c0_42] : memref<9x32xf32, #tpu.memory_space<vmem>>, vector<9x32xf32>
    %c0_43 = arith.constant 0 : index
    %c0_44 = arith.constant 0 : index
    %c0_45 = arith.constant 0 : index
    %42 = vector.load %arg12[%c0_43, %c0_44, %c0_45] : memref<18x18x32xf32, #tpu.memory_space<vmem>>, vector<16x16x32xf32>
    %43 = vector.extract_strided_slice %41 {offsets = [0, 0], sizes = [1, 32], strides = [1, 1]} : vector<9x32xf32> to vector<1x32xf32>
    %44 = vector.shape_cast %43 : vector<1x32xf32> to vector<32xf32>
    %45 = vector.shape_cast %44 : vector<32xf32> to vector<1x1x32xf32>
    %46 = vector.broadcast %45 : vector<1x1x32xf32> to vector<16x16x32xf32>
    %47 = arith.mulf %42, %46 : vector<16x16x32xf32>
    %c0_46 = arith.constant 0 : index
    %c1_47 = arith.constant 1 : index
    %c0_48 = arith.constant 0 : index
    %48 = vector.load %arg12[%c0_46, %c1_47, %c0_48] : memref<18x18x32xf32, #tpu.memory_space<vmem>>, vector<16x16x32xf32>
    %49 = vector.extract_strided_slice %41 {offsets = [1, 0], sizes = [1, 32], strides = [1, 1]} : vector<9x32xf32> to vector<1x32xf32>
    %50 = vector.shape_cast %49 : vector<1x32xf32> to vector<32xf32>
    %51 = vector.shape_cast %50 : vector<32xf32> to vector<1x1x32xf32>
    %52 = vector.broadcast %51 : vector<1x1x32xf32> to vector<16x16x32xf32>
    %53 = arith.mulf %48, %52 : vector<16x16x32xf32>
    %54 = arith.addf %47, %53 : vector<16x16x32xf32>
    %c0_49 = arith.constant 0 : index
    %c2 = arith.constant 2 : index
    %c0_50 = arith.constant 0 : index
    %55 = vector.load %arg12[%c0_49, %c2, %c0_50] : memref<18x18x32xf32, #tpu.memory_space<vmem>>, vector<16x16x32xf32>
    %56 = vector.extract_strided_slice %41 {offsets = [2, 0], sizes = [1, 32], strides = [1, 1]} : vector<9x32xf32> to vector<1x32xf32>
    %57 = vector.shape_cast %56 : vector<1x32xf32> to vector<32xf32>
    %58 = vector.shape_cast %57 : vector<32xf32> to vector<1x1x32xf32>
    %59 = vector.broadcast %58 : vector<1x1x32xf32> to vector<16x16x32xf32>
    %60 = arith.mulf %55, %59 : vector<16x16x32xf32>
    %61 = arith.addf %54, %60 : vector<16x16x32xf32>
    %c1_51 = arith.constant 1 : index
    %c0_52 = arith.constant 0 : index
    %c0_53 = arith.constant 0 : index
    %62 = vector.load %arg12[%c1_51, %c0_52, %c0_53] : memref<18x18x32xf32, #tpu.memory_space<vmem>>, vector<16x16x32xf32>
    %63 = vector.extract_strided_slice %41 {offsets = [3, 0], sizes = [1, 32], strides = [1, 1]} : vector<9x32xf32> to vector<1x32xf32>
    %64 = vector.shape_cast %63 : vector<1x32xf32> to vector<32xf32>
    %65 = vector.shape_cast %64 : vector<32xf32> to vector<1x1x32xf32>
    %66 = vector.broadcast %65 : vector<1x1x32xf32> to vector<16x16x32xf32>
    %67 = arith.mulf %62, %66 : vector<16x16x32xf32>
    %68 = arith.addf %61, %67 : vector<16x16x32xf32>
    %c1_54 = arith.constant 1 : index
    %c1_55 = arith.constant 1 : index
    %c0_56 = arith.constant 0 : index
    %69 = vector.load %arg12[%c1_54, %c1_55, %c0_56] : memref<18x18x32xf32, #tpu.memory_space<vmem>>, vector<16x16x32xf32>
    %70 = vector.extract_strided_slice %41 {offsets = [4, 0], sizes = [1, 32], strides = [1, 1]} : vector<9x32xf32> to vector<1x32xf32>
    %71 = vector.shape_cast %70 : vector<1x32xf32> to vector<32xf32>
    %72 = vector.shape_cast %71 : vector<32xf32> to vector<1x1x32xf32>
    %73 = vector.broadcast %72 : vector<1x1x32xf32> to vector<16x16x32xf32>
    %74 = arith.mulf %69, %73 : vector<16x16x32xf32>
    %75 = arith.addf %68, %74 : vector<16x16x32xf32>
    %c1_57 = arith.constant 1 : index
    %c2_58 = arith.constant 2 : index
    %c0_59 = arith.constant 0 : index
    %76 = vector.load %arg12[%c1_57, %c2_58, %c0_59] : memref<18x18x32xf32, #tpu.memory_space<vmem>>, vector<16x16x32xf32>
    %77 = vector.extract_strided_slice %41 {offsets = [5, 0], sizes = [1, 32], strides = [1, 1]} : vector<9x32xf32> to vector<1x32xf32>
    %78 = vector.shape_cast %77 : vector<1x32xf32> to vector<32xf32>
    %79 = vector.shape_cast %78 : vector<32xf32> to vector<1x1x32xf32>
    %80 = vector.broadcast %79 : vector<1x1x32xf32> to vector<16x16x32xf32>
    %81 = arith.mulf %76, %80 : vector<16x16x32xf32>
    %82 = arith.addf %75, %81 : vector<16x16x32xf32>
    %c2_60 = arith.constant 2 : index
    %c0_61 = arith.constant 0 : index
    %c0_62 = arith.constant 0 : index
    %83 = vector.load %arg12[%c2_60, %c0_61, %c0_62] : memref<18x18x32xf32, #tpu.memory_space<vmem>>, vector<16x16x32xf32>
    %84 = vector.extract_strided_slice %41 {offsets = [6, 0], sizes = [1, 32], strides = [1, 1]} : vector<9x32xf32> to vector<1x32xf32>
    %85 = vector.shape_cast %84 : vector<1x32xf32> to vector<32xf32>
    %86 = vector.shape_cast %85 : vector<32xf32> to vector<1x1x32xf32>
    %87 = vector.broadcast %86 : vector<1x1x32xf32> to vector<16x16x32xf32>
    %88 = arith.mulf %83, %87 : vector<16x16x32xf32>
    %89 = arith.addf %82, %88 : vector<16x16x32xf32>
    %c2_63 = arith.constant 2 : index
    %c1_64 = arith.constant 1 : index
    %c0_65 = arith.constant 0 : index
    %90 = vector.load %arg12[%c2_63, %c1_64, %c0_65] : memref<18x18x32xf32, #tpu.memory_space<vmem>>, vector<16x16x32xf32>
    %91 = vector.extract_strided_slice %41 {offsets = [7, 0], sizes = [1, 32], strides = [1, 1]} : vector<9x32xf32> to vector<1x32xf32>
    %92 = vector.shape_cast %91 : vector<1x32xf32> to vector<32xf32>
    %93 = vector.shape_cast %92 : vector<32xf32> to vector<1x1x32xf32>
    %94 = vector.broadcast %93 : vector<1x1x32xf32> to vector<16x16x32xf32>
    %95 = arith.mulf %90, %94 : vector<16x16x32xf32>
    %96 = arith.addf %89, %95 : vector<16x16x32xf32>
    %c2_66 = arith.constant 2 : index
    %c2_67 = arith.constant 2 : index
    %c0_68 = arith.constant 0 : index
    %97 = vector.load %arg12[%c2_66, %c2_67, %c0_68] : memref<18x18x32xf32, #tpu.memory_space<vmem>>, vector<16x16x32xf32>
    %98 = vector.extract_strided_slice %41 {offsets = [8, 0], sizes = [1, 32], strides = [1, 1]} : vector<9x32xf32> to vector<1x32xf32>
    %99 = vector.shape_cast %98 : vector<1x32xf32> to vector<32xf32>
    %100 = vector.shape_cast %99 : vector<32xf32> to vector<1x1x32xf32>
    %101 = vector.broadcast %100 : vector<1x1x32xf32> to vector<16x16x32xf32>
    %102 = arith.mulf %97, %101 : vector<16x16x32xf32>
    %103 = arith.addf %96, %102 : vector<16x16x32xf32>
    %c0_69 = arith.constant 0 : index
    %c0_70 = arith.constant 0 : index
    %104 = vector.load %arg8[%c0_69, %c0_70] : memref<1x32xf32, #tpu.memory_space<vmem>>, vector<1x32xf32>
    %105 = vector.shape_cast %104 : vector<1x32xf32> to vector<1x1x32xf32>
    %106 = vector.broadcast %105 : vector<1x1x32xf32> to vector<16x16x32xf32>
    %107 = arith.addf %103, %106 : vector<16x16x32xf32>
    %cst_71 = arith.constant 0.000000e+00 : f32
    %cst_72 = arith.constant 6.000000e+00 : f32
    %108 = vector.broadcast %cst_71 : f32 to vector<16x16x32xf32>
    %109 = arith.maximumf %108, %107 : vector<16x16x32xf32>
    %110 = vector.broadcast %cst_72 : f32 to vector<16x16x32xf32>
    %111 = arith.minimumf %110, %109 : vector<16x16x32xf32>
    %112 = vector.shape_cast %111 : vector<16x16x32xf32> to vector<256x32xf32>
    %c0_73 = arith.constant 0 : index
    %c0_74 = arith.constant 0 : index
    %113 = vector.load %arg9[%c0_73, %c0_74] : memref<32x8xf32, #tpu.memory_space<vmem>>, vector<32x8xf32>
    %cst_75 = arith.constant dense<0.000000e+00> : vector<256x8xf32>
    %114 = tpu.matmul %112, %113, %cst_75 {dimension_numbers = #tpu.dot_dimension_numbers<[1], [0], [0], [1], [0, 0, 1, 1], [], []>} : vector<256x32xf32>, vector<32x8xf32>, vector<256x8xf32> -> vector<256x8xf32>
    %c0_76 = arith.constant 0 : index
    %c0_77 = arith.constant 0 : index
    %115 = vector.load %arg10[%c0_76, %c0_77] : memref<1x8xf32, #tpu.memory_space<vmem>>, vector<1x8xf32>
    %116 = vector.broadcast %115 : vector<1x8xf32> to vector<256x8xf32>
    %117 = arith.addf %114, %116 : vector<256x8xf32>
    %118 = vector.shape_cast %117 : vector<256x8xf32> to vector<1x16x16x8xf32>
    %c0_78 = arith.constant 0 : index
    %c0_79 = arith.constant 0 : index
    %c0_80 = arith.constant 0 : index
    %c0_81 = arith.constant 0 : index
    %119 = vector.load %arg11[%c0_78, %c0_79, %c0_80, %c0_81] : memref<1x16x16x8xf32, #tpu.memory_space<vmem>>, vector<1x16x16x8xf32>
    tpu.vector_store %arg11[%c0_78, %c0_79, %c0_80, %c0_81], %118 {strides = array<i32>} : memref<1x16x16x8xf32, #tpu.memory_space<vmem>>, vector<1x16x16x8xf32>,
    return
  }
  func.func @transform_0(%arg0: i32, %arg1: i32) -> (i32, i32, i32, i32) {
    %c0_i32 = arith.constant 0 : i32
    %c0_i32_0 = arith.constant 0 : i32
    %c0_i32_1 = arith.constant 0 : i32
    return %arg0, %arg1, %c0_i32, %c0_i32_0 : i32, i32, i32, i32
  }
  func.func @transform_1(%arg0: i32, %arg1: i32) -> (i32, i32, i32, i32, i32) {
    %c0_i32 = arith.constant 0 : i32
    %c0_i32_0 = arith.constant 0 : i32
    %c0_i32_1 = arith.constant 0 : i32
    %c0_i32_2 = arith.constant 0 : i32
    return %arg0, %arg1, %c0_i32, %c0_i32_0, %c0_i32_1 : i32, i32, i32, i32, i32
  }
  func.func @transform_2(%arg0: i32, %arg1: i32) -> (i32, i32, i32, i32, i32) {
    %c0_i32 = arith.constant 0 : i32
    %c0_i32_0 = arith.constant 0 : i32
    %c0_i32_1 = arith.constant 0 : i32
    %c0_i32_2 = arith.constant 0 : i32
    return %arg0, %arg1, %c0_i32, %c0_i32_0, %c0_i32_1 : i32, i32, i32, i32, i32
  }
  func.func @transform_3(%arg0: i32, %arg1: i32) -> (i32, i32) {
    %c0_i32 = arith.constant 0 : i32
    %c0_i32_0 = arith.constant 0 : i32
    %c0_i32_1 = arith.constant 0 : i32
    return %c0_i32, %c0_i32_0 : i32, i32
  }
  func.func @transform_4(%arg0: i32, %arg1: i32) -> (i32, i32) {
    %c0_i32 = arith.constant 0 : i32
    %c0_i32_0 = arith.constant 0 : i32
    %c0_i32_1 = arith.constant 0 : i32
    return %c0_i32, %c0_i32_0 : i32, i32
  }
  func.func @transform_5(%arg0: i32, %arg1: i32) -> (i32, i32) {
    %c0_i32 = arith.constant 0 : i32
    %c0_i32_0 = arith.constant 0 : i32
    %c0_i32_1 = arith.constant 0 : i32
    return %c0_i32, %c0_i32_0 : i32, i32
  }
  func.func @transform_6(%arg0: i32, %arg1: i32) -> (i32, i32) {
    %c0_i32 = arith.constant 0 : i32
    %c0_i32_0 = arith.constant 0 : i32
    %c0_i32_1 = arith.constant 0 : i32
    return %c0_i32, %c0_i32_0 : i32, i32
  }
  func.func @transform_7(%arg0: i32, %arg1: i32) -> (i32, i32) {
    %c0_i32 = arith.constant 0 : i32
    %c0_i32_0 = arith.constant 0 : i32
    %c0_i32_1 = arith.constant 0 : i32
    return %c0_i32, %c0_i32_0 : i32, i32
  }
  func.func @transform_8(%arg0: i32, %arg1: i32) -> (i32, i32) {
    %c0_i32 = arith.constant 0 : i32
    %c0_i32_0 = arith.constant 0 : i32
    %c0_i32_1 = arith.constant 0 : i32
    return %c0_i32, %c0_i32_0 : i32, i32
  }
  func.func @transform_9(%arg0: i32, %arg1: i32) -> (i32, i32, i32, i32) {
    %c0_i32 = arith.constant 0 : i32
    %c0_i32_0 = arith.constant 0 : i32
    %c0_i32_1 = arith.constant 0 : i32
    return %arg0, %arg1, %c0_i32, %c0_i32_0 : i32, i32, i32, i32
  }
}

</mosaic_0001>

<llo_original>
// kernel: tpu_custom_call.1
$region0: #{tpu_custom_call.1}
  #allocation0 [shape = 'u32[]', space=smem, size = 0x4, offset = 0x4, fixed_abs, tag = 'smem constant byte address 0x4 - core index']
  #allocation1 [shape = 'u32[144,128]{1,0:T(1,128)}', space=vmem, size = 0x12000, scoped, tag = 'internal scratch']
  #allocation2 [shape = 'f32[18,18,32]{2,1,0:T(8,128)}', space=vmem, size = 0x36000, scoped, tag = 'scratch operand']
  %s0 = inlined_call_operand.vmem [shape: f32[2,16,16,8], index: 0, kind: input, shape index: {}]
  %s1 = inlined_call_operand.vmem [shape: f32[2,1,1,16,8], index: 1, kind: input, shape index: {}]
  %s2 = inlined_call_operand.vmem [shape: f32[2,1,1,16,8], index: 2, kind: input, shape index: {}]
  %s3 = inlined_call_operand.vmem [shape: f32[8,32], index: 3, kind: input, shape index: {}]
  %s4 = inlined_call_operand.vmem [shape: f32[1,32], index: 4, kind: input, shape index: {}]
  %s5 = inlined_call_operand.vmem [shape: f32[9,32], index: 5, kind: input, shape index: {}]
  %s6 = inlined_call_operand.vmem [shape: f32[1,32], index: 6, kind: input, shape index: {}]
  %s7 = inlined_call_operand.vmem [shape: f32[32,8], index: 7, kind: input, shape index: {}]
  %s8 = inlined_call_operand.vmem [shape: f32[1,8], index: 8, kind: input, shape index: {}]
  %s9 = inlined_call_operand.vmem [shape: f32[2,16,16,8], index: 9, kind: output, shape index: {}]
  %s10 = sld [smem:[#allocation0]]
  $region69: #{tpu_custom_call.1} parent=0
    _
  %s12 = ssub.s32 1, %s10
  %s13 = scalar_select 0, %s12, %s10
  loop: start=0, step=1, limit=4
  $region2: #{tpu_custom_call.1} parent=0 // loop_pre_header
    _
  $region3: #{tpu_custom_call.1} parent=0 // loop_header
    %s15 = sphi 0, %s19
    %p16 = scmp.ge.s32.totalorder %s15, 4
    %s22 = sphi 0, %s34
    %s23 = sphi 0, %s30
    %s24 = sphi 0, %s22
    %s25 = sphi 0, %s23
    %s26 = sphi 0, %s24
    %s27 = sphi 0, %s25
    %s39 = sphi 0, %s41
    %s42 = sphi 0, %s39
    %s43 = sphi 0, %s42
    %s59 = sphi 0, %s43
    %s67 = sphi 0, %s69
    %s70 = sphi 0, %s67
    %s71 = sphi 0, %s70
    %s87 = sphi 0, %s71
    %s95 = sphi 0, %s97
    %s98 = sphi 0, %s95
    %s99 = sphi 0, %s98
    %s115 = sphi 0, %s99
    %s119 = sphi 0, %s119
    %s121 = sphi 0, %s119
    %s122 = sphi 0, %s121
    %s136 = sphi 0, %s122
    %s140 = sphi 0, %s140
    %s142 = sphi 0, %s140
    %s143 = sphi 0, %s142
    %s157 = sphi 0, %s143
    %s161 = sphi 0, %s161
    %s163 = sphi 0, %s161
    %s164 = sphi 0, %s163
    %s178 = sphi 0, %s164
    %s182 = sphi 0, %s182
    %s184 = sphi 0, %s182
    %s185 = sphi 0, %s184
    %s199 = sphi 0, %s185
    %s203 = sphi 0, %s203
    %s205 = sphi 0, %s203
    %s206 = sphi 0, %s205
    %s220 = sphi 0, %s206
    %s224 = sphi 0, %s224
    %s226 = sphi 0, %s224
    %s227 = sphi 0, %s226
    %s241 = sphi 0, %s227
    %s249 = sphi 0, %s251
    %s252 = sphi 0, %s249
    %s253 = sphi 0, %s252
    %s269 = sphi 0, %s253
  $region4: #{tpu_custom_call.1} parent=0 // loop_header_branch
    %18 = sbr.rel (%p16) target = $region8
  $region5: #{tpu_custom_call.1} parent=0 // loop_body
    %s20 = ssub.s32 %s15, 1
    %s21 = ssub.s32 %s15, 2
    %s28 = sadd.s32 1, %s23
    %p29 = scmp.ge.s32.totalorder %s28, 1
    %s30 = scalar_select %p29, 0, %s28
    %s31 = sadd.s32 1, %s22
    %s32 = scalar_select %p29, %s31, %s22
    %p33 = scmp.ge.s32.totalorder %s32, 2
    %s34 = scalar_select %p33, 0, %s32
    %s35 = ssub.s32 %s22, %s34
    %s36 = ssub.s32 %s23, %s30
    %s37 = sor.u32 %s35, %s36
    %p38 = scmp.eq.s32.totalorder %s37, 0
    %s40 = sadd.s32 %s39, 1
    %s41 = scalar_select %p38, %s39, %s40
    %p44 = pneg %p38
    %p45 = scmp.eq.s32.totalorder %s15, 1
    %p46 = por %p44, %p45
    %p47 = scmp.ne.s32.totalorder %s39, %s42
    %p48 = scmp.eq.s32.totalorder %s15, 0
    %p49 = por %p47, %p48
    %p50 = scmp.ne.s32.totalorder %s39, %s42
    %p51 = scmp.eq.s32.totalorder %s20, 1
    %p52 = por %p50, %p51
    %p53 = scmp.ne.s32.totalorder %s42, %s43
    %p54 = scmp.eq.s32.totalorder %s20, 0
    %p55 = por %p53, %p54
    %p56 = scmp.ne.s32.totalorder %s42, %s43
    %p57 = scmp.eq.s32.totalorder %s21, 1
    %p58 = por %p56, %p57
    %p60 = scmp.ne.s32.totalorder %s43, %s59
    %p61 = scmp.eq.s32.totalorder %s21, 0
    %p62 = por %p60, %p61
    %s63 = ssub.s32 %s22, %s34
    %s64 = ssub.s32 %s23, %s30
    %s65 = sor.u32 %s63, %s64
    %p66 = scmp.eq.s32.totalorder %s65, 0
    %s68 = sadd.s32 %s67, 1
    %s69 = scalar_select %p66, %s67, %s68
    %p72 = pneg %p66
    %p73 = scmp.eq.s32.totalorder %s15, 1
    %p74 = por %p72, %p73
    %p75 = scmp.ne.s32.totalorder %s67, %s70
    %p76 = scmp.eq.s32.totalorder %s15, 0
    %p77 = por %p75, %p76
    %p78 = scmp.ne.s32.totalorder %s67, %s70
    %p79 = scmp.eq.s32.totalorder %s20, 1
    %p80 = por %p78, %p79
    %p81 = scmp.ne.s32.totalorder %s70, %s71
    %p82 = scmp.eq.s32.totalorder %s20, 0
    %p83 = por %p81, %p82
    %p84 = scmp.ne.s32.totalorder %s70, %s71
    %p85 = scmp.eq.s32.totalorder %s21, 1
    %p86 = por %p84, %p85
    %p88 = scmp.ne.s32.totalorder %s71, %s87
    %p89 = scmp.eq.s32.totalorder %s21, 0
    %p90 = por %p88, %p89
    %s91 = ssub.s32 %s22, %s34
    %s92 = ssub.s32 %s23, %s30
    %s93 = sor.u32 %s91, %s92
    %p94 = scmp.eq.s32.totalorder %s93, 0
    %s96 = sadd.s32 %s95, 1
    %s97 = scalar_select %p94, %s95, %s96
    %p100 = pneg %p94
    %p101 = scmp.eq.s32.totalorder %s15, 1
    %p102 = por %p100, %p101
    %p103 = scmp.ne.s32.totalorder %s95, %s98
    %p104 = scmp.eq.s32.totalorder %s15, 0
    %p105 = por %p103, %p104
    %p106 = scmp.ne.s32.totalorder %s95, %s98
    %p107 = scmp.eq.s32.totalorder %s20, 1
    %p108 = por %p106, %p107
    %p109 = scmp.ne.s32.totalorder %s98, %s99
    %p110 = scmp.eq.s32.totalorder %s20, 0
    %p111 = por %p109, %p110
    %p112 = scmp.ne.s32.totalorder %s98, %s99
    %p113 = scmp.eq.s32.totalorder %s21, 1
    %p114 = por %p112, %p113
    %p116 = scmp.ne.s32.totalorder %s99, %s115
    %p117 = scmp.eq.s32.totalorder %s21, 0
    %p118 = por %p116, %p117
    %s120 = sadd.s32 %s119, 1
    %p123 = scmp.eq.s32.totalorder %s15, 1
    %p124 = scmp.ne.s32.totalorder %s119, %s121
    %p125 = scmp.eq.s32.totalorder %s15, 0
    %p126 = por %p124, %p125
    %p127 = scmp.ne.s32.totalorder %s119, %s121
    %p128 = scmp.eq.s32.totalorder %s20, 1
    %p129 = por %p127, %p128
    %p130 = scmp.ne.s32.totalorder %s121, %s122
    %p131 = scmp.eq.s32.totalorder %s20, 0
    %p132 = por %p130, %p131
    %p133 = scmp.ne.s32.totalorder %s121, %s122
    %p134 = scmp.eq.s32.totalorder %s21, 1
    %p135 = por %p133, %p134
    %p137 = scmp.ne.s32.totalorder %s122, %s136
    %p138 = scmp.eq.s32.totalorder %s21, 0
    %p139 = por %p137, %p138
    %s141 = sadd.s32 %s140, 1
    %p144 = scmp.eq.s32.totalorder %s15, 1
    %p145 = scmp.ne.s32.totalorder %s140, %s142
    %p146 = scmp.eq.s32.totalorder %s15, 0
    %p147 = por %p145, %p146
    %p148 = scmp.ne.s32.totalorder %s140, %s142
    %p149 = scmp.eq.s32.totalorder %s20, 1
    %p150 = por %p148, %p149
    %p151 = scmp.ne.s32.totalorder %s142, %s143
    %p152 = scmp.eq.s32.totalorder %s20, 0
    %p153 = por %p151, %p152
    %p154 = scmp.ne.s32.totalorder %s142, %s143
    %p155 = scmp.eq.s32.totalorder %s21, 1
    %p156 = por %p154, %p155
    %p158 = scmp.ne.s32.totalorder %s143, %s157
    %p159 = scmp.eq.s32.totalorder %s21, 0
    %p160 = por %p158, %p159
    %s162 = sadd.s32 %s161, 1
    %p165 = scmp.eq.s32.totalorder %s15, 1
    %p166 = scmp.ne.s32.totalorder %s161, %s163
    %p167 = scmp.eq.s32.totalorder %s15, 0
    %p168 = por %p166, %p167
    %p169 = scmp.ne.s32.totalorder %s161, %s163
    %p170 = scmp.eq.s32.totalorder %s20, 1
    %p171 = por %p169, %p170
    %p172 = scmp.ne.s32.totalorder %s163, %s164
    %p173 = scmp.eq.s32.totalorder %s20, 0
    %p174 = por %p172, %p173
    %p175 = scmp.ne.s32.totalorder %s163, %s164
    %p176 = scmp.eq.s32.totalorder %s21, 1
    %p177 = por %p175, %p176
    %p179 = scmp.ne.s32.totalorder %s164, %s178
    %p180 = scmp.eq.s32.totalorder %s21, 0
    %p181 = por %p179, %p180
    %s183 = sadd.s32 %s182, 1
    %p186 = scmp.eq.s32.totalorder %s15, 1
    %p187 = scmp.ne.s32.totalorder %s182, %s184
    %p188 = scmp.eq.s32.totalorder %s15, 0
    %p189 = por %p187, %p188
    %p190 = scmp.ne.s32.totalorder %s182, %s184
    %p191 = scmp.eq.s32.totalorder %s20, 1
    %p192 = por %p190, %p191
    %p193 = scmp.ne.s32.totalorder %s184, %s185
    %p194 = scmp.eq.s32.totalorder %s20, 0
    %p195 = por %p193, %p194
    %p196 = scmp.ne.s32.totalorder %s184, %s185
    %p197 = scmp.eq.s32.totalorder %s21, 1
    %p198 = por %p196, %p197
    %p200 = scmp.ne.s32.totalorder %s185, %s199
    %p201 = scmp.eq.s32.totalorder %s21, 0
    %p202 = por %p200, %p201
    %s204 = sadd.s32 %s203, 1
    %p207 = scmp.eq.s32.totalorder %s15, 1
    %p208 = scmp.ne.s32.totalorder %s203, %s205
    %p209 = scmp.eq.s32.totalorder %s15, 0
    %p210 = por %p208, %p209
    %p211 = scmp.ne.s32.totalorder %s203, %s205
    %p212 = scmp.eq.s32.totalorder %s20, 1
    %p213 = por %p211, %p212
    %p214 = scmp.ne.s32.totalorder %s205, %s206
    %p215 = scmp.eq.s32.totalorder %s20, 0
    %p216 = por %p214, %p215
    %p217 = scmp.ne.s32.totalorder %s205, %s206
    %p218 = scmp.eq.s32.totalorder %s21, 1
    %p219 = por %p217, %p218
    %p221 = scmp.ne.s32.totalorder %s206, %s220
    %p222 = scmp.eq.s32.totalorder %s21, 0
    %p223 = por %p221, %p222
    %s225 = sadd.s32 %s224, 1
    %p228 = scmp.eq.s32.totalorder %s15, 1
    %p229 = scmp.ne.s32.totalorder %s224, %s226
    %p230 = scmp.eq.s32.totalorder %s15, 0
    %p231 = por %p229, %p230
    %p232 = scmp.ne.s32.totalorder %s224, %s226
    %p233 = scmp.eq.s32.totalorder %s20, 1
    %p234 = por %p232, %p233
    %p235 = scmp.ne.s32.totalorder %s226, %s227
    %p236 = scmp.eq.s32.totalorder %s20, 0
    %p237 = por %p235, %p236
    %p238 = scmp.ne.s32.totalorder %s226, %s227
    %p239 = scmp.eq.s32.totalorder %s21, 1
    %p240 = por %p238, %p239
    %p242 = scmp.ne.s32.totalorder %s227, %s241
    %p243 = scmp.eq.s32.totalorder %s21, 0
    %p244 = por %p242, %p243
    %s245 = ssub.s32 %s22, %s34
    %s246 = ssub.s32 %s23, %s30
    %s247 = sor.u32 %s245, %s246
    %p248 = scmp.eq.s32.totalorder %s247, 0
    %s250 = sadd.s32 %s249, 1
    %s251 = scalar_select %p248, %s249, %s250
    %p254 = pneg %p248
    %p255 = scmp.eq.s32.totalorder %s15, 1
    %p256 = por %p254, %p255
    %p257 = scmp.ne.s32.totalorder %s249, %s252
    %p258 = scmp.eq.s32.totalorder %s15, 0
    %p259 = por %p257, %p258
    %p260 = scmp.ne.s32.totalorder %s249, %s252
    %p261 = scmp.eq.s32.totalorder %s20, 1
    %p262 = por %p260, %p261
    %p263 = scmp.ne.s32.totalorder %s252, %s253
    %p264 = scmp.eq.s32.totalorder %s20, 0
    %p265 = por %p263, %p264
    %p266 = scmp.ne.s32.totalorder %s252, %s253
    %p267 = scmp.eq.s32.totalorder %s21, 1
    %p268 = por %p266, %p267
    %p270 = scmp.ne.s32.totalorder %s253, %s269
    %p271 = scmp.eq.s32.totalorder %s21, 0
    %p272 = por %p270, %p271
    %p273 = scmp.le.s32.totalorder 1, %s15
    %p274 = scmp.lt.s32.totalorder %s15, 3
    %p275 = pnand %p273, %p274
    %p276 = pneg %p275
    // Predicated region
    $region9: #{tpu_custom_call.1} parent=5 // pred_check
      _
    $region10: #{tpu_custom_call.1} parent=5 // pred_check_branch
      %278 = sbr.rel (%p275) target = $region12
    $region11: #{tpu_custom_call.1} parent=5 // pred_region
      %s279 = ssub.s32 %s15, 1
      // Predicated region
      $region13: #{tpu_custom_call.1} parent=11 // pred_check
        %p280 = pneg %p132
      $region14: #{tpu_custom_call.1} parent=11 // pred_check_branch
        %282 = sbr.rel (%p280) target = $region16
      $region15: #{tpu_custom_call.1} parent=11 // pred_region
        _
      $region16: #{tpu_custom_call.1} parent=11 // pred_fallthru
        _
      // Predicated region
      $region17: #{tpu_custom_call.1} parent=11 // pred_check
        %p283 = pneg %p153
      $region18: #{tpu_custom_call.1} parent=11 // pred_check_branch
        %285 = sbr.rel (%p283) target = $region20
      $region19: #{tpu_custom_call.1} parent=11 // pred_region
        _
      $region20: #{tpu_custom_call.1} parent=11 // pred_fallthru
        _
      // Predicated region
      $region21: #{tpu_custom_call.1} parent=11 // pred_check
        %p286 = pneg %p174
      $region22: #{tpu_custom_call.1} parent=11 // pred_check_branch
        %288 = sbr.rel (%p286) target = $region24
      $region23: #{tpu_custom_call.1} parent=11 // pred_region
        _
      $region24: #{tpu_custom_call.1} parent=11 // pred_fallthru
        _
      // Predicated region
      $region25: #{tpu_custom_call.1} parent=11 // pred_check
        %p289 = pneg %p195
      $region26: #{tpu_custom_call.1} parent=11 // pred_check_branch
        %291 = sbr.rel (%p289) target = $region28
      $region27: #{tpu_custom_call.1} parent=11 // pred_region
        _
      $region28: #{tpu_custom_call.1} parent=11 // pred_fallthru
        _
      // Predicated region
      $region29: #{tpu_custom_call.1} parent=11 // pred_check
        %p292 = pneg %p216
      $region30: #{tpu_custom_call.1} parent=11 // pred_check_branch
        %294 = sbr.rel (%p292) target = $region32
      $region31: #{tpu_custom_call.1} parent=11 // pred_region
        _
      $region32: #{tpu_custom_call.1} parent=11 // pred_fallthru
        _
      // Predicated region
      $region33: #{tpu_custom_call.1} parent=11 // pred_check
        %p295 = pneg %p237
      $region34: #{tpu_custom_call.1} parent=11 // pred_check_branch
        %297 = sbr.rel (%p295) target = $region36
      $region35: #{tpu_custom_call.1} parent=11 // pred_region
        _
      $region36: #{tpu_custom_call.1} parent=11 // pred_fallthru
        _
    $region12: #{tpu_custom_call.1} parent=5 // pred_fallthru
      _
    %p298 = scmp.lt.s32.totalorder %s15, 2
    // Predicated region
    $region37: #{tpu_custom_call.1} parent=5 // pred_check
      %p299 = pneg %p298
    $region38: #{tpu_custom_call.1} parent=5 // pred_check_branch
      %301 = sbr.rel (%p299) target = $region40
    $region39: #{tpu_custom_call.1} parent=5 // pred_region
      // Predicated region
      $region41: #{tpu_custom_call.1} parent=39 // pred_check
        %p302 = pneg %p49
      $region42: #{tpu_custom_call.1} parent=39 // pred_check_branch
        %304 = sbr.rel (%p302) target = $region44
      $region43: #{tpu_custom_call.1} parent=39 // pred_region
        %s305 = smul.u32 16, %s23
        %p306 = scmp.lt.s32.totalorder %s22, 1
        %s307 = scalar_select %p306, %s22, 1
        %p308 = scmp.lt.s32.totalorder %s305, 15
        %s309 = scalar_select %p308, %s305, 15
        %s310 = smul.addr %s309, 2
        %s311 = smul.addr %s307, 32
        %s312 = sadd.s32 %s310, %s311
        %s313 = smul.addr %s312, 8
        %s314 = scalar_lea.vmem %s0, %s313
        %s315 = smul.u32 16, %s23
      $region44: #{tpu_custom_call.1} parent=39 // pred_fallthru
        _
      // Predicated region
      $region45: #{tpu_custom_call.1} parent=39 // pred_check
        %p316 = pneg %p77
      $region46: #{tpu_custom_call.1} parent=39 // pred_check_branch
        %318 = sbr.rel (%p316) target = $region48
      $region47: #{tpu_custom_call.1} parent=39 // pred_region
        %p319 = scmp.lt.s32.totalorder %s22, 1
        %s320 = scalar_select %p319, %s22, 1
        %p321 = scmp.lt.s32.totalorder %s23, 0
        %s322 = scalar_select %p321, %s23, 0
        %s323 = smul.addr %s322, 2
        %s324 = smul.addr %s320, 2
        %s325 = sadd.s32 %s323, %s324
        %s326 = smul.addr %s325, 8
        %s327 = scalar_lea.vmem %s1, %s326
      $region48: #{tpu_custom_call.1} parent=39 // pred_fallthru
        _
      // Predicated region
      $region49: #{tpu_custom_call.1} parent=39 // pred_check
        %p328 = pneg %p105
      $region50: #{tpu_custom_call.1} parent=39 // pred_check_branch
        %330 = sbr.rel (%p328) target = $region52
      $region51: #{tpu_custom_call.1} parent=39 // pred_region
        %p331 = scmp.lt.s32.totalorder %s22, 1
        %s332 = scalar_select %p331, %s22, 1
        %p333 = scmp.lt.s32.totalorder %s23, 0
        %s334 = scalar_select %p333, %s23, 0
        %s335 = smul.addr %s334, 2
        %s336 = smul.addr %s332, 2
        %s337 = sadd.s32 %s335, %s336
        %s338 = smul.addr %s337, 8
        %s339 = scalar_lea.vmem %s2, %s338
      $region52: #{tpu_custom_call.1} parent=39 // pred_fallthru
        _
    $region40: #{tpu_custom_call.1} parent=5 // pred_fallthru
      _
    %p340 = scmp.le.s32.totalorder 1, %s15
    %p341 = scmp.lt.s32.totalorder %s15, 3
    %p342 = pnand %p340, %p341
    %p343 = pneg %p342
    // Predicated region
    $region53: #{tpu_custom_call.1} parent=5 // pred_check
      _
    $region54: #{tpu_custom_call.1} parent=5 // pred_check_branch
      %345 = sbr.rel (%p342) target = $region56
    $region55: #{tpu_custom_call.1} parent=5 // pred_region
      %s346 = ssub.s32 %s15, 1
      %s347 = smul.u32 16, %s25
      %p348 = scmp.lt.s32.totalorder %s24, 1
      %s349 = scalar_select %p348, %s24, 1
      %p350 = scmp.lt.s32.totalorder %s347, 15
      %s351 = scalar_select %p350, %s347, 15
      %s352 = smul.addr %s351, 2
      %s353 = smul.addr %s349, 32
      %s354 = sadd.s32 %s352, %s353
      %s355 = smul.addr %s354, 8
      %s356 = scalar_lea.vmem %s0, %s355
      %p357 = pneg %p55
      %p358 = pneg %p52
      %p359 = scmp.lt.s32.totalorder %s24, 1
      %s360 = scalar_select %p359, %s24, 1
      %p361 = scmp.lt.s32.totalorder %s25, 0
      %s362 = scalar_select %p361, %s25, 0
      %s363 = smul.addr %s362, 2
      %s364 = smul.addr %s360, 2
      %s365 = sadd.s32 %s363, %s364
      %s366 = smul.addr %s365, 8
      %s367 = scalar_lea.vmem %s1, %s366
      %p368 = pneg %p83
      %p369 = pneg %p80
      %p370 = scmp.lt.s32.totalorder %s24, 1
      %s371 = scalar_select %p370, %s24, 1
      %p372 = scmp.lt.s32.totalorder %s25, 0
      %s373 = scalar_select %p372, %s25, 0
      %s374 = smul.addr %s373, 2
      %s375 = smul.addr %s371, 2
      %s376 = sadd.s32 %s374, %s375
      %s377 = smul.addr %s376, 8
      %s378 = scalar_lea.vmem %s2, %s377
      %p379 = pneg %p111
      %p380 = pneg %p108
      %p381 = pneg %p132
      %p382 = pneg %p129
      %p383 = pneg %p153
      %p384 = pneg %p150
      %p385 = pneg %p174
      %p386 = pneg %p171
      %p387 = pneg %p195
      %p388 = pneg %p192
      %p389 = pneg %p216
      %p390 = pneg %p213
      %p391 = pneg %p237
      %p392 = pneg %p234
      %p393 = pneg %p265
      %p394 = pneg %p262
      %s395 = smul.u32 16, %s25
      %p396 = scmp.lt.s32.totalorder %s24, 1
      %s397 = scalar_select %p396, %s24, 1
      %p398 = scmp.lt.s32.totalorder %s395, 15
      %s399 = scalar_select %p398, %s395, 15
      %s400 = smul.addr %s399, 2
      %s401 = smul.addr %s397, 32
      %s402 = sadd.s32 %s400, %s401
      %s403 = smul.addr %s402, 8
      %s404 = scalar_lea.vmem %s9, %s403
      %s405 = smul.u32 16, %s25
      %p406 = scmp.lt.s32.totalorder %s24, 1
      %s407 = scalar_select %p406, %s24, 1
      %p408 = scmp.lt.s32.totalorder %s405, 15
      %s409 = scalar_select %p408, %s405, 15
      %s410 = smul.addr %s409, 2
      %s411 = smul.addr %s407, 32
      %s412 = sadd.s32 %s410, %s411
      %s413 = smul.addr %s412, 8
      %s414 = scalar_lea.vmem %s0, %s413
      %s415 = smul.u32 16, %s25
      %p416 = scmp.lt.s32.totalorder %s24, 1
      %s417 = scalar_select %p416, %s24, 1
      %p418 = scmp.lt.s32.totalorder %s25, 0
      %s419 = scalar_select %p418, %s25, 0
      %s420 = smul.addr %s419, 2
      %s421 = smul.addr %s417, 2
      %s422 = sadd.s32 %s420, %s421
      %s423 = smul.addr %s422, 8
      %s424 = scalar_lea.vmem %s1, %s423
      %p425 = scmp.lt.s32.totalorder %s24, 1
      %s426 = scalar_select %p425, %s24, 1
      %p427 = scmp.lt.s32.totalorder %s25, 0
      %s428 = scalar_select %p427, %s25, 0
      %s429 = smul.addr %s428, 2
      %s430 = smul.addr %s426, 2
      %s431 = sadd.s32 %s429, %s430
      %s432 = smul.addr %s431, 8
      %s433 = scalar_lea.vmem %s2, %s432
      %s434 = smul.u32 16, %s25
      %p435 = scmp.lt.s32.totalorder %s24, 1
      %s436 = scalar_select %p435, %s24, 1
      %p437 = scmp.lt.s32.totalorder %s434, 15
      %s438 = scalar_select %p437, %s434, 15
      %s439 = smul.addr %s438, 2
      %s440 = smul.addr %s436, 32
      %s441 = sadd.s32 %s439, %s440
      %s442 = smul.addr %s441, 8
      %s443 = scalar_lea.vmem %s9, %s442
      %s444 = smul.u32 16, %s25
      %v445 = vld [vmem:[%s3] sm:$0xff]
      %v446 = vld [vmem:[%s4] sm:$0x1]
      %v447 = vld [vmem:[%s414] sm:$0xff]
      %v448 = vld [vmem:[%s414 + $0x8] sm:$0xff]
      %v449 = vld [vmem:[%s414 + $0x10] sm:$0xff]
      %v450 = vld [vmem:[%s414 + $0x18] sm:$0xff]
      %v451 = vld [vmem:[%s414 + $0x20] sm:$0xff]
      %v452 = vld [vmem:[%s414 + $0x28] sm:$0xff]
      %v453 = vld [vmem:[%s414 + $0x30] sm:$0xff]
      %v454 = vld [vmem:[%s414 + $0x38] sm:$0xff]
      %v455 = vld [vmem:[%s414 + $0x40] sm:$0xff]
      %v456 = vld [vmem:[%s414 + $0x48] sm:$0xff]
      %v457 = vld [vmem:[%s414 + $0x50] sm:$0xff]
      %v458 = vld [vmem:[%s414 + $0x58] sm:$0xff]
      %v459 = vld [vmem:[%s414 + $0x60] sm:$0xff]
      %v460 = vld [vmem:[%s414 + $0x68] sm:$0xff]
      %v461 = vld [vmem:[%s414 + $0x70] sm:$0xff]
      %v462 = vld [vmem:[%s414 + $0x78] sm:$0xff]
      %v463 = vld [vmem:[%s414 + $0x80] sm:$0xff]
      %v464 = vld [vmem:[%s414 + $0x88] sm:$0xff]
      %v465 = vld [vmem:[%s414 + $0x90] sm:$0xff]
      %v466 = vld [vmem:[%s414 + $0x98] sm:$0xff]
      %v467 = vld [vmem:[%s414 + $0xa0] sm:$0xff]
      %v468 = vld [vmem:[%s414 + $0xa8] sm:$0xff]
      %v469 = vld [vmem:[%s414 + $0xb0] sm:$0xff]
      %v470 = vld [vmem:[%s414 + $0xb8] sm:$0xff]
      %v471 = vld [vmem:[%s414 + $0xc0] sm:$0xff]
      %v472 = vld [vmem:[%s414 + $0xc8] sm:$0xff]
      %v473 = vld [vmem:[%s414 + $0xd0] sm:$0xff]
      %v474 = vld [vmem:[%s414 + $0xd8] sm:$0xff]
      %v475 = vld [vmem:[%s414 + $0xe0] sm:$0xff]
      %v476 = vld [vmem:[%s414 + $0xe8] sm:$0xff]
      %v477 = vld [vmem:[%s414 + $0xf0] sm:$0xff]
      %v478 = vld [vmem:[%s414 + $0xf8] sm:$0xff]
      %v480 = vlaneseq
      %v481 = vshrl.u32 %v480, 7
      %v482 = vsub.s32 0, %v481
      %v483 = vrot.slane %v446, %v482
      %vm485 = vcmask 64512
      %v487 = vsel %vm485, %v447, 0
      %v490 = vsel %vm485, %v448, 0
      %v493 = vsel %vm485, %v449, 0
      %v496 = vsel %vm485, %v450, 0
      %v499 = vsel %vm485, %v451, 0
      %v502 = vsel %vm485, %v452, 0
      %v505 = vsel %vm485, %v453, 0
      %v508 = vsel %vm485, %v454, 0
      %v511 = vsel %vm485, %v455, 0
      %v514 = vsel %vm485, %v456, 0
      %v517 = vsel %vm485, %v457, 0
      %v520 = vsel %vm485, %v458, 0
      %v523 = vsel %vm485, %v459, 0
      %v526 = vsel %vm485, %v460, 0
      %v529 = vsel %vm485, %v461, 0
      %v532 = vsel %vm485, %v462, 0
      %v535 = vsel %vm485, %v463, 0
      %v538 = vsel %vm485, %v464, 0
      %v541 = vsel %vm485, %v465, 0
      %v544 = vsel %vm485, %v466, 0
      %v547 = vsel %vm485, %v467, 0
      %v550 = vsel %vm485, %v468, 0
      %v553 = vsel %vm485, %v469, 0
      %v556 = vsel %vm485, %v470, 0
      %v559 = vsel %vm485, %v471, 0
      %v562 = vsel %vm485, %v472, 0
      %v565 = vsel %vm485, %v473, 0
      %v568 = vsel %vm485, %v474, 0
      %v571 = vsel %vm485, %v475, 0
      %v574 = vsel %vm485, %v476, 0
      %v577 = vsel %vm485, %v477, 0
      %v580 = vsel %vm485, %v478, 0
      %582 = vmatprep.subr.mxu0 0.0
      %583 = vmatpush1.msra.mxu0 %v445
      %584 = vmatprep.subr.mxu0 0.0
      %585 = vmatpush1.msra.mxu0 0.0
      %586 = vmatprep.subr.mxu0 0.0
      %587 = vmatpush1.msra.mxu0 0.0
      %588 = vmatprep.subr.mxu0 0.0
      %589 = vmatpush1.msra.mxu0 0.0
      %590 = vmatprep.subr.mxu0 0.0
      %591 = vmatpush1.msra.mxu0 0.0
      %592 = vmatprep.subr.mxu0 0.0
      %593 = vmatpush1.msra.mxu0 0.0
      %594 = vmatprep.subr.mxu0 0.0
      %595 = vmatpush1.msra.mxu0 0.0
      %596 = vmatprep.subr.mxu0 0.0
      %597 = vmatpush1.msra.mxu0 0.0
      %598 = vmatprep.subr.mxu0 0.0
      %599 = vmatpush1.msra.mxu0 0.0
      %600 = vmatprep.subr.mxu0 0.0
      %601 = vmatpush1.msra.mxu0 0.0
      %602 = vmatprep.subr.mxu0 0.0
      %603 = vmatpush1.msra.mxu0 0.0
      %604 = vmatprep.subr.mxu0 0.0
      %605 = vmatpush1.msra.mxu0 0.0
      %606 = vmatprep.subr.mxu0 0.0
      %607 = vmatpush1.msra.mxu0 0.0
      %608 = vmatprep.subr.mxu0 0.0
      %609 = vmatpush1.msra.mxu0 0.0
      %610 = vmatprep.subr.mxu0 0.0
      %611 = vmatpush1.msra.mxu0 0.0
      %612 = vmatprep.subr.mxu0 0.0
      %613 = vmatpush1.msra.mxu0 0.0
      %614 = vmatprep.subr.mxu0 0.0
      %615 = vmatpush1.msra.mxu0 0.0
      %616 = vmatprep.subr.mxu0 0.0
      %617 = vmatpush1.msra.mxu0 0.0
      %618 = vmatprep.subr.mxu0 0.0
      %619 = vmatpush1.msra.mxu0 0.0
      %620 = vmatprep.subr.mxu0 0.0
      %621 = vmatpush1.msra.mxu0 0.0
      %622 = vmatprep.subr.mxu0 0.0
      %623 = vmatpush1.msra.mxu0 0.0
      %624 = vmatprep.subr.mxu0 0.0
      %625 = vmatpush1.msra.mxu0 0.0
      %626 = vmatprep.subr.mxu0 0.0
      %627 = vmatpush1.msra.mxu0 0.0
      %628 = vmatprep.subr.mxu0 0.0
      %629 = vmatpush1.msra.mxu0 0.0
      %630 = vmatprep.subr.mxu0 0.0
      %631 = vmatpush1.msra.mxu0 0.0
      %632 = vmatprep.subr.mxu0 0.0
      %633 = vmatpush1.msra.mxu0 0.0
      %634 = vmatprep.subr.mxu0 0.0
      %635 = vmatpush1.msra.mxu0 0.0
      %636 = vmatprep.subr.mxu0 0.0
      %637 = vmatpush1.msra.mxu0 0.0
      %638 = vmatprep.subr.mxu0 0.0
      %639 = vmatpush1.msra.mxu0 0.0
      %640 = vmatprep.subr.mxu0 0.0
      %641 = vmatpush1.msra.mxu0 0.0
      %642 = vmatprep.subr.mxu0 0.0
      %643 = vmatpush1.msra.mxu0 0.0
      %644 = vmatprep.subr.mxu0 0.0
      %645 = vmatpush1.msra.mxu0 0.0
      %646 = vmatprep.mubr.f32.mxu0 0.0
      %647 = vmatmul.mubr.f32.gmra.mrb[0].mxu0 %v487
      %v648 = vpop.f32.mrb[0].mxu0
      %v649 = vadd.f32 %v483, %v648
      %v650 = vpop.f32.mrb[0].mxu0
      %651 = vmatprep.mubr.f32.mxu0 0.0
      %652 = vmatmul.mubr.f32.gmra.mrb[0].mxu0 %v490
      %v653 = vpop.f32.mrb[0].mxu0
      %v654 = vadd.f32 %v483, %v653
      %v655 = vpop.f32.mrb[0].mxu0
      %656 = vmatprep.mubr.f32.mxu0 0.0
      %657 = vmatmul.mubr.f32.gmra.mrb[0].mxu0 %v493
      %v658 = vpop.f32.mrb[0].mxu0
      %v659 = vadd.f32 %v483, %v658
      %v660 = vpop.f32.mrb[0].mxu0
      %661 = vmatprep.mubr.f32.mxu0 0.0
      %662 = vmatmul.mubr.f32.gmra.mrb[0].mxu0 %v496
      %v663 = vpop.f32.mrb[0].mxu0
      %v664 = vadd.f32 %v483, %v663
      %v665 = vpop.f32.mrb[0].mxu0
      %666 = vmatprep.mubr.f32.mxu0 0.0
      %667 = vmatmul.mubr.f32.gmra.mrb[0].mxu0 %v499
      %v668 = vpop.f32.mrb[0].mxu0
      %v669 = vadd.f32 %v483, %v668
      %v670 = vpop.f32.mrb[0].mxu0
      %671 = vmatprep.mubr.f32.mxu0 0.0
      %672 = vmatmul.mubr.f32.gmra.mrb[0].mxu0 %v502
      %v673 = vpop.f32.mrb[0].mxu0
      %v674 = vadd.f32 %v483, %v673
      %v675 = vpop.f32.mrb[0].mxu0
      %676 = vmatprep.mubr.f32.mxu0 0.0
      %677 = vmatmul.mubr.f32.gmra.mrb[0].mxu0 %v505
      %v678 = vpop.f32.mrb[0].mxu0
      %v679 = vadd.f32 %v483, %v678
      %v680 = vpop.f32.mrb[0].mxu0
      %681 = vmatprep.mubr.f32.mxu0 0.0
      %682 = vmatmul.mubr.f32.gmra.mrb[0].mxu0 %v508
      %v683 = vpop.f32.mrb[0].mxu0
      %v684 = vadd.f32 %v483, %v683
      %v685 = vpop.f32.mrb[0].mxu0
      %686 = vmatprep.mubr.f32.mxu0 0.0
      %687 = vmatmul.mubr.f32.gmra.mrb[0].mxu0 %v511
      %v688 = vpop.f32.mrb[0].mxu0
      %v689 = vadd.f32 %v483, %v688
      %v690 = vpop.f32.mrb[0].mxu0
      %691 = vmatprep.mubr.f32.mxu0 0.0
      %692 = vmatmul.mubr.f32.gmra.mrb[0].mxu0 %v514
      %v693 = vpop.f32.mrb[0].mxu0
      %v694 = vadd.f32 %v483, %v693
      %v695 = vpop.f32.mrb[0].mxu0
      %696 = vmatprep.mubr.f32.mxu0 0.0
      %697 = vmatmul.mubr.f32.gmra.mrb[0].mxu0 %v517
      %v698 = vpop.f32.mrb[0].mxu0
      %v699 = vadd.f32 %v483, %v698
      %v700 = vpop.f32.mrb[0].mxu0
      %701 = vmatprep.mubr.f32.mxu0 0.0
      %702 = vmatmul.mubr.f32.gmra.mrb[0].mxu0 %v520
      %v703 = vpop.f32.mrb[0].mxu0
      %v704 = vadd.f32 %v483, %v703
      %v705 = vpop.f32.mrb[0].mxu0
      %706 = vmatprep.mubr.f32.mxu0 0.0
      %707 = vmatmul.mubr.f32.gmra.mrb[0].mxu0 %v523
      %v708 = vpop.f32.mrb[0].mxu0
      %v709 = vadd.f32 %v483, %v708
      %v710 = vpop.f32.mrb[0].mxu0
      %711 = vmatprep.mubr.f32.mxu0 0.0
      %712 = vmatmul.mubr.f32.gmra.mrb[0].mxu0 %v526
      %v713 = vpop.f32.mrb[0].mxu0
      %v714 = vadd.f32 %v483, %v713
      %v715 = vpop.f32.mrb[0].mxu0
      %716 = vmatprep.mubr.f32.mxu0 0.0
      %717 = vmatmul.mubr.f32.gmra.mrb[0].mxu0 %v529
      %v718 = vpop.f32.mrb[0].mxu0
      %v719 = vadd.f32 %v483, %v718
      %v720 = vpop.f32.mrb[0].mxu0
      %721 = vmatprep.mubr.f32.mxu0 0.0
      %722 = vmatmul.mubr.f32.gmra.mrb[0].mxu0 %v532
      %v723 = vpop.f32.mrb[0].mxu0
      %v724 = vadd.f32 %v483, %v723
      %v725 = vpop.f32.mrb[0].mxu0
      %726 = vmatprep.mubr.f32.mxu0 0.0
      %727 = vmatmul.mubr.f32.gmra.mrb[0].mxu0 %v535
      %v728 = vpop.f32.mrb[0].mxu0
      %v729 = vadd.f32 %v483, %v728
      %v730 = vpop.f32.mrb[0].mxu0
      %731 = vmatprep.mubr.f32.mxu0 0.0
      %732 = vmatmul.mubr.f32.gmra.mrb[0].mxu0 %v538
      %v733 = vpop.f32.mrb[0].mxu0
      %v734 = vadd.f32 %v483, %v733
      %v735 = vpop.f32.mrb[0].mxu0
      %736 = vmatprep.mubr.f32.mxu0 0.0
      %737 = vmatmul.mubr.f32.gmra.mrb[0].mxu0 %v541
      %v738 = vpop.f32.mrb[0].mxu0
      %v739 = vadd.f32 %v483, %v738
      %v740 = vpop.f32.mrb[0].mxu0
      %741 = vmatprep.mubr.f32.mxu0 0.0
      %742 = vmatmul.mubr.f32.gmra.mrb[0].mxu0 %v544
      %v743 = vpop.f32.mrb[0].mxu0
      %v744 = vadd.f32 %v483, %v743
      %v745 = vpop.f32.mrb[0].mxu0
      %746 = vmatprep.mubr.f32.mxu0 0.0
      %747 = vmatmul.mubr.f32.gmra.mrb[0].mxu0 %v547
      %v748 = vpop.f32.mrb[0].mxu0
      %v749 = vadd.f32 %v483, %v748
      %v750 = vpop.f32.mrb[0].mxu0
      %751 = vmatprep.mubr.f32.mxu0 0.0
      %752 = vmatmul.mubr.f32.gmra.mrb[0].mxu0 %v550
      %v753 = vpop.f32.mrb[0].mxu0
      %v754 = vadd.f32 %v483, %v753
      %v755 = vpop.f32.mrb[0].mxu0
      %756 = vmatprep.mubr.f32.mxu0 0.0
      %757 = vmatmul.mubr.f32.gmra.mrb[0].mxu0 %v553
      %v758 = vpop.f32.mrb[0].mxu0
      %v759 = vadd.f32 %v483, %v758
      %v760 = vpop.f32.mrb[0].mxu0
      %761 = vmatprep.mubr.f32.mxu0 0.0
      %762 = vmatmul.mubr.f32.gmra.mrb[0].mxu0 %v556
      %v763 = vpop.f32.mrb[0].mxu0
      %v764 = vadd.f32 %v483, %v763
      %v765 = vpop.f32.mrb[0].mxu0
      %766 = vmatprep.mubr.f32.mxu0 0.0
      %767 = vmatmul.mubr.f32.gmra.mrb[0].mxu0 %v559
      %v768 = vpop.f32.mrb[0].mxu0
      %v769 = vadd.f32 %v483, %v768
      %v770 = vpop.f32.mrb[0].mxu0
      %771 = vmatprep.mubr.f32.mxu0 0.0
      %772 = vmatmul.mubr.f32.gmra.mrb[0].mxu0 %v562
      %v773 = vpop.f32.mrb[0].mxu0
      %v774 = vadd.f32 %v483, %v773
      %v775 = vpop.f32.mrb[0].mxu0
      %776 = vmatprep.mubr.f32.mxu0 0.0
      %777 = vmatmul.mubr.f32.gmra.mrb[0].mxu0 %v565
      %v778 = vpop.f32.mrb[0].mxu0
      %v779 = vadd.f32 %v483, %v778
      %v780 = vpop.f32.mrb[0].mxu0
      %781 = vmatprep.mubr.f32.mxu0 0.0
      %782 = vmatmul.mubr.f32.gmra.mrb[0].mxu0 %v568
      %v783 = vpop.f32.mrb[0].mxu0
      %v784 = vadd.f32 %v483, %v783
      %v785 = vpop.f32.mrb[0].mxu0
      %786 = vmatprep.mubr.f32.mxu0 0.0
      %787 = vmatmul.mubr.f32.gmra.mrb[0].mxu0 %v571
      %v788 = vpop.f32.mrb[0].mxu0
      %v789 = vadd.f32 %v483, %v788
      %v790 = vpop.f32.mrb[0].mxu0
      %791 = vmatprep.mubr.f32.mxu0 0.0
      %792 = vmatmul.mubr.f32.gmra.mrb[0].mxu0 %v574
      %v793 = vpop.f32.mrb[0].mxu0
      %v794 = vadd.f32 %v483, %v793
      %v795 = vpop.f32.mrb[0].mxu0
      %796 = vmatprep.mubr.f32.mxu0 0.0
      %797 = vmatmul.mubr.f32.gmra.mrb[0].mxu0 %v577
      %v798 = vpop.f32.mrb[0].mxu0
      %v799 = vadd.f32 %v483, %v798
      %v800 = vpop.f32.mrb[0].mxu0
      %801 = vmatprep.mubr.f32.mxu0 0.0
      %802 = vmatmul.mubr.f32.gmra.mrb[0].mxu0 %v580
      %v803 = vpop.f32.mrb[0].mxu0
      %v804 = vadd.f32 %v483, %v803
      %v805 = vpop.f32.mrb[0].mxu0
      %806 = vdwg.mxu0
      %v807 = vmax.f32 %v649, 0.0
      %v808 = vmax.f32 %v654, 0.0
      %v809 = vmax.f32 %v659, 0.0
      %v810 = vmax.f32 %v664, 0.0
      %v811 = vmax.f32 %v669, 0.0
      %v812 = vmax.f32 %v674, 0.0
      %v813 = vmax.f32 %v679, 0.0
      %v814 = vmax.f32 %v684, 0.0
      %v815 = vmax.f32 %v689, 0.0
      %v816 = vmax.f32 %v694, 0.0
      %v817 = vmax.f32 %v699, 0.0
      %v818 = vmax.f32 %v704, 0.0
      %v819 = vmax.f32 %v709, 0.0
      %v820 = vmax.f32 %v714, 0.0
      %v821 = vmax.f32 %v719, 0.0
      %v822 = vmax.f32 %v724, 0.0
      %v823 = vmax.f32 %v729, 0.0
      %v824 = vmax.f32 %v734, 0.0
      %v825 = vmax.f32 %v739, 0.0
      %v826 = vmax.f32 %v744, 0.0
      %v827 = vmax.f32 %v749, 0.0
      %v828 = vmax.f32 %v754, 0.0
      %v829 = vmax.f32 %v759, 0.0
      %v830 = vmax.f32 %v764, 0.0
      %v831 = vmax.f32 %v769, 0.0
      %v832 = vmax.f32 %v774, 0.0
      %v833 = vmax.f32 %v779, 0.0
      %v834 = vmax.f32 %v784, 0.0
      %v835 = vmax.f32 %v789, 0.0
      %v836 = vmax.f32 %v794, 0.0
      %v837 = vmax.f32 %v799, 0.0
      %v838 = vmax.f32 %v804, 0.0
      %v839 = vmin.f32 %v807, 6.0
      %v840 = vmin.f32 %v808, 6.0
      %v841 = vmin.f32 %v809, 6.0
      %v842 = vmin.f32 %v810, 6.0
      %v843 = vmin.f32 %v811, 6.0
      %v844 = vmin.f32 %v812, 6.0
      %v845 = vmin.f32 %v813, 6.0
      %v846 = vmin.f32 %v814, 6.0
      %v847 = vmin.f32 %v815, 6.0
      %v848 = vmin.f32 %v816, 6.0
      %v849 = vmin.f32 %v817, 6.0
      %v850 = vmin.f32 %v818, 6.0
      %v851 = vmin.f32 %v819, 6.0
      %v852 = vmin.f32 %v820, 6.0
      %v853 = vmin.f32 %v821, 6.0
      %v854 = vmin.f32 %v822, 6.0
      %v855 = vmin.f32 %v823, 6.0
      %v856 = vmin.f32 %v824, 6.0
      %v857 = vmin.f32 %v825, 6.0
      %v858 = vmin.f32 %v826, 6.0
      %v859 = vmin.f32 %v827, 6.0
      %v860 = vmin.f32 %v828, 6.0
      %v861 = vmin.f32 %v829, 6.0
      %v862 = vmin.f32 %v830, 6.0
      %v863 = vmin.f32 %v831, 6.0
      %v864 = vmin.f32 %v832, 6.0
      %v865 = vmin.f32 %v833, 6.0
      %v866 = vmin.f32 %v834, 6.0
      %v867 = vmin.f32 %v835, 6.0
      %v868 = vmin.f32 %v836, 6.0
      %v869 = vmin.f32 %v837, 6.0
      %v870 = vmin.f32 %v838, 6.0
      %s871 = scalar_lea.vmem [#allocation2], 24
      %vm872 = vcmask 261120
      %873 = vst.msk [vmem:[%s871 + $0x1] sm:$0xff] %vm872, %v839
      %874 = vst.msk [vmem:[%s871 + $0x9] sm:$0xff] %vm872, %v840
      %875 = vst.msk [vmem:[%s871 + $0x19] sm:$0xff] %vm872, %v841
      %876 = vst.msk [vmem:[%s871 + $0x21] sm:$0xff] %vm872, %v842
      %877 = vst.msk [vmem:[%s871 + $0x31] sm:$0xff] %vm872, %v843
      %878 = vst.msk [vmem:[%s871 + $0x39] sm:$0xff] %vm872, %v844
      %879 = vst.msk [vmem:[%s871 + $0x49] sm:$0xff] %vm872, %v845
      %880 = vst.msk [vmem:[%s871 + $0x51] sm:$0xff] %vm872, %v846
      %881 = vst.msk [vmem:[%s871 + $0x61] sm:$0xff] %vm872, %v847
      %882 = vst.msk [vmem:[%s871 + $0x69] sm:$0xff] %vm872, %v848
      %883 = vst.msk [vmem:[%s871 + $0x79] sm:$0xff] %vm872, %v849
      %884 = vst.msk [vmem:[%s871 + $0x81] sm:$0xff] %vm872, %v850
      %885 = vst.msk [vmem:[%s871 + $0x91] sm:$0xff] %vm872, %v851
      %886 = vst.msk [vmem:[%s871 + $0x99] sm:$0xff] %vm872, %v852
      %887 = vst.msk [vmem:[%s871 + $0xa9] sm:$0xff] %vm872, %v853
      %888 = vst.msk [vmem:[%s871 + $0xb1] sm:$0xff] %vm872, %v854
      %889 = vst.msk [vmem:[%s871 + $0xc1] sm:$0xff] %vm872, %v855
      %890 = vst.msk [vmem:[%s871 + $0xc9] sm:$0xff] %vm872, %v856
      %891 = vst.msk [vmem:[%s871 + $0xd9] sm:$0xff] %vm872, %v857
      %892 = vst.msk [vmem:[%s871 + $0xe1] sm:$0xff] %vm872, %v858
      %893 = vst.msk [vmem:[%s871 + $0xf1] sm:$0xff] %vm872, %v859
      %894 = vst.msk [vmem:[%s871 + $0xf9] sm:$0xff] %vm872, %v860
      %895 = vst.msk [vmem:[%s871 + $0x109] sm:$0xff] %vm872, %v861
      %896 = vst.msk [vmem:[%s871 + $0x111] sm:$0xff] %vm872, %v862
      %897 = vst.msk [vmem:[%s871 + $0x121] sm:$0xff] %vm872, %v863
      %898 = vst.msk [vmem:[%s871 + $0x129] sm:$0xff] %vm872, %v864
      %899 = vst.msk [vmem:[%s871 + $0x139] sm:$0xff] %vm872, %v865
      %900 = vst.msk [vmem:[%s871 + $0x141] sm:$0xff] %vm872, %v866
      %901 = vst.msk [vmem:[%s871 + $0x151] sm:$0xff] %vm872, %v867
      %902 = vst.msk [vmem:[%s871 + $0x159] sm:$0xff] %vm872, %v868
      %903 = vst.msk [vmem:[%s871 + $0x169] sm:$0xff] %vm872, %v869
      %904 = vst.msk [vmem:[%s871 + $0x171] sm:$0xff] %vm872, %v870
      %v905 = vld [vmem:[%s424] sm:$0xff]
      %v906 = vld [vmem:[%s424 + $0x8] sm:$0xff]
      %v907 = vld [vmem:[%s433] sm:$0xff]
      %v908 = vld [vmem:[%s433 + $0x8] sm:$0xff]
      %v910 = vsel %vm485, %v905, 0
      %v913 = vsel %vm485, %v906, 0
      %v916 = vsel %vm485, %v907, 0
      %v919 = vsel %vm485, %v908, 0
      %921 = vmatprep.subr.mxu0 0.0
      %922 = vmatpush1.msra.mxu0 %v445
      %923 = vmatprep.subr.mxu0 0.0
      %924 = vmatpush1.msra.mxu0 0.0
      %925 = vmatprep.subr.mxu0 0.0
      %926 = vmatpush1.msra.mxu0 0.0
      %927 = vmatprep.subr.mxu0 0.0
      %928 = vmatpush1.msra.mxu0 0.0
      %929 = vmatprep.subr.mxu0 0.0
      %930 = vmatpush1.msra.mxu0 0.0
      %931 = vmatprep.subr.mxu0 0.0
      %932 = vmatpush1.msra.mxu0 0.0
      %933 = vmatprep.subr.mxu0 0.0
      %934 = vmatpush1.msra.mxu0 0.0
      %935 = vmatprep.subr.mxu0 0.0
      %936 = vmatpush1.msra.mxu0 0.0
      %937 = vmatprep.subr.mxu0 0.0
      %938 = vmatpush1.msra.mxu0 0.0
      %939 = vmatprep.subr.mxu0 0.0
      %940 = vmatpush1.msra.mxu0 0.0
      %941 = vmatprep.subr.mxu0 0.0
      %942 = vmatpush1.msra.mxu0 0.0
      %943 = vmatprep.subr.mxu0 0.0
      %944 = vmatpush1.msra.mxu0 0.0
      %945 = vmatprep.subr.mxu0 0.0
      %946 = vmatpush1.msra.mxu0 0.0
      %947 = vmatprep.subr.mxu0 0.0
      %948 = vmatpush1.msra.mxu0 0.0
      %949 = vmatprep.subr.mxu0 0.0
      %950 = vmatpush1.msra.mxu0 0.0
      %951 = vmatprep.subr.mxu0 0.0
      %952 = vmatpush1.msra.mxu0 0.0
      %953 = vmatprep.subr.mxu0 0.0
      %954 = vmatpush1.msra.mxu0 0.0
      %955 = vmatprep.subr.mxu0 0.0
      %956 = vmatpush1.msra.mxu0 0.0
      %957 = vmatprep.subr.mxu0 0.0
      %958 = vmatpush1.msra.mxu0 0.0
      %959 = vmatprep.subr.mxu0 0.0
      %960 = vmatpush1.msra.mxu0 0.0
      %961 = vmatprep.subr.mxu0 0.0
      %962 = vmatpush1.msra.mxu0 0.0
      %963 = vmatprep.subr.mxu0 0.0
      %964 = vmatpush1.msra.mxu0 0.0
      %965 = vmatprep.subr.mxu0 0.0
      %966 = vmatpush1.msra.mxu0 0.0
      %967 = vmatprep.subr.mxu0 0.0
      %968 = vmatpush1.msra.mxu0 0.0
      %969 = vmatprep.subr.mxu0 0.0
      %970 = vmatpush1.msra.mxu0 0.0
      %971 = vmatprep.subr.mxu0 0.0
      %972 = vmatpush1.msra.mxu0 0.0
      %973 = vmatprep.subr.mxu0 0.0
      %974 = vmatpush1.msra.mxu0 0.0
      %975 = vmatprep.subr.mxu0 0.0
      %976 = vmatpush1.msra.mxu0 0.0
      %977 = vmatprep.subr.mxu0 0.0
      %978 = vmatpush1.msra.mxu0 0.0
      %979 = vmatprep.subr.mxu0 0.0
      %980 = vmatpush1.msra.mxu0 0.0
      %981 = vmatprep.subr.mxu0 0.0
      %982 = vmatpush1.msra.mxu0 0.0
      %983 = vmatprep.subr.mxu0 0.0
      %984 = vmatpush1.msra.mxu0 0.0
      %985 = vmatprep.mubr.f32.mxu0 0.0
      %986 = vmatmul.mubr.f32.gmra.mrb[0].mxu0 %v910
      %v987 = vpop.f32.mrb[0].mxu0
      %v988 = vadd.f32 %v483, %v987
      %v989 = vpop.f32.mrb[0].mxu0
      %990 = vmatprep.mubr.f32.mxu0 0.0
      %991 = vmatmul.mubr.f32.gmra.mrb[0].mxu0 %v913
      %v992 = vpop.f32.mrb[0].mxu0
      %v993 = vadd.f32 %v483, %v992
      %v994 = vpop.f32.mrb[0].mxu0
      %995 = vmatprep.mubr.f32.mxu0 0.0
      %996 = vmatmul.mubr.f32.gmra.mrb[0].mxu0 %v916
      %v997 = vpop.f32.mrb[0].mxu0
      %v998 = vadd.f32 %v483, %v997
      %v999 = vpop.f32.mrb[0].mxu0
      %1000 = vmatprep.mubr.f32.mxu0 0.0
      %1001 = vmatmul.mubr.f32.gmra.mrb[0].mxu0 %v919
      %v1002 = vpop.f32.mrb[0].mxu0
      %v1003 = vadd.f32 %v483, %v1002
      %v1004 = vpop.f32.mrb[0].mxu0
      %1005 = vdwg.mxu0
      %v1006 = vmax.f32 %v988, 0.0
      %v1007 = vmax.f32 %v993, 0.0
      %v1008 = vmax.f32 %v998, 0.0
      %v1009 = vmax.f32 %v1003, 0.0
      %v1010 = vmin.f32 %v1006, 6.0
      %v1011 = vmin.f32 %v1007, 6.0
      %v1012 = vmin.f32 %v1008, 6.0
      %v1013 = vmin.f32 %v1009, 6.0
      %p1014 = scmp.gt.s32.totalorder %s25, 0
      %s1015 = scalar_select %p1014, 1.0, 0.0
      %p1016 = scmp.lt.s32.totalorder %s25, 0
      %s1017 = scalar_select %p1016, 1.0, 0.0
      %v1018 = vstv %s1015
      %v1019 = vmul.f32 %v1010, %v1018
      %v1020 = vmul.f32 %v1011, %v1018
      %1021 = vst.msk [vmem:[#allocation2 + $0x1] sm:$0xff] %vm872, %v1019
      %1022 = vst.msk [vmem:[#allocation2 + $0x9] sm:$0xff] %vm872, %v1020
      %v1023 = vstv %s1017
      %v1024 = vmul.f32 %v1012, %v1023
      %v1025 = vmul.f32 %v1013, %v1023
      %s1026 = scalar_lea.vmem [#allocation2], 408
      %1027 = vst.msk [vmem:[%s1026 + $0x1] sm:$0xff] %vm872, %v1024
      %1028 = vst.msk [vmem:[%s1026 + $0x9] sm:$0xff] %vm872, %v1025
      %vm1029 = vcmask 253952
      %1030 = vst.msk [vmem:[#allocation2] sm:$0x1] %vm1029, 0.0
      %1031 = vst.msk [vmem:[#allocation2 + $0x18] sm:$0x1] %vm1029, 0.0
      %1032 = vst.msk [vmem:[#allocation2 + $0x30] sm:$0x1] %vm1029, 0.0
      %1033 = vst.msk [vmem:[#allocation2 + $0x48] sm:$0x1] %vm1029, 0.0
      %1034 = vst.msk [vmem:[#allocation2 + $0x60] sm:$0x1] %vm1029, 0.0
      %1035 = vst.msk [vmem:[#allocation2 + $0x78] sm:$0x1] %vm1029, 0.0
      %1036 = vst.msk [vmem:[#allocation2 + $0x90] sm:$0x1] %vm1029, 0.0
      %1037 = vst.msk [vmem:[#allocation2 + $0xa8] sm:$0x1] %vm1029, 0.0
      %1038 = vst.msk [vmem:[#allocation2 + $0xc0] sm:$0x1] %vm1029, 0.0
      %1039 = vst.msk [vmem:[#allocation2 + $0xd8] sm:$0x1] %vm1029, 0.0
      %1040 = vst.msk [vmem:[#allocation2 + $0xf0] sm:$0x1] %vm1029, 0.0
      %1041 = vst.msk [vmem:[#allocation2 + $0x108] sm:$0x1] %vm1029, 0.0
      %1042 = vst.msk [vmem:[#allocation2 + $0x120] sm:$0x1] %vm1029, 0.0
      %1043 = vst.msk [vmem:[#allocation2 + $0x138] sm:$0x1] %vm1029, 0.0
      %1044 = vst.msk [vmem:[#allocation2 + $0x150] sm:$0x1] %vm1029, 0.0
      %1045 = vst.msk [vmem:[#allocation2 + $0x168] sm:$0x1] %vm1029, 0.0
      %1046 = vst.msk [vmem:[#allocation2 + $0x180] sm:$0x1] %vm1029, 0.0
      %1047 = vst.msk [vmem:[#allocation2 + $0x198] sm:$0x1] %vm1029, 0.0
      %1048 = vst.msk [vmem:[#allocation2 + $0x11] sm:$0x1] %vm1029, 0.0
      %1049 = vst.msk [vmem:[#allocation2 + $0x29] sm:$0x1] %vm1029, 0.0
      %1050 = vst.msk [vmem:[#allocation2 + $0x41] sm:$0x1] %vm1029, 0.0
      %1051 = vst.msk [vmem:[#allocation2 + $0x59] sm:$0x1] %vm1029, 0.0
      %1052 = vst.msk [vmem:[#allocation2 + $0x71] sm:$0x1] %vm1029, 0.0
      %1053 = vst.msk [vmem:[#allocation2 + $0x89] sm:$0x1] %vm1029, 0.0
      %1054 = vst.msk [vmem:[#allocation2 + $0xa1] sm:$0x1] %vm1029, 0.0
      %1055 = vst.msk [vmem:[#allocation2 + $0xb9] sm:$0x1] %vm1029, 0.0
      %1056 = vst.msk [vmem:[#allocation2 + $0xd1] sm:$0x1] %vm1029, 0.0
      %1057 = vst.msk [vmem:[#allocation2 + $0xe9] sm:$0x1] %vm1029, 0.0
      %1058 = vst.msk [vmem:[#allocation2 + $0x101] sm:$0x1] %vm1029, 0.0
      %1059 = vst.msk [vmem:[#allocation2 + $0x119] sm:$0x1] %vm1029, 0.0
      %1060 = vst.msk [vmem:[#allocation2 + $0x131] sm:$0x1] %vm1029, 0.0
      %1061 = vst.msk [vmem:[#allocation2 + $0x149] sm:$0x1] %vm1029, 0.0
      %1062 = vst.msk [vmem:[#allocation2 + $0x161] sm:$0x1] %vm1029, 0.0
      %1063 = vst.msk [vmem:[#allocation2 + $0x179] sm:$0x1] %vm1029, 0.0
      %1064 = vst.msk [vmem:[#allocation2 + $0x191] sm:$0x1] %vm1029, 0.0
      %1065 = vst.msk [vmem:[#allocation2 + $0x1a9] sm:$0x1] %vm1029, 0.0
      %v1066 = vld [vmem:[%s5] sm:$0xff]
      %v1067 = vld [vmem:[%s5 + $0x8] sm:$0x1]
      %v1068 = vld [vmem:[#allocation2] sm:$0xff]
      %v1069 = vld [vmem:[#allocation2 + $0x8] sm:$0xff]
      %v1070 = vld [vmem:[#allocation2 + $0x18] sm:$0xff]
      %v1071 = vld [vmem:[#allocation2 + $0x20] sm:$0xff]
      %v1072 = vld [vmem:[#allocation2 + $0x30] sm:$0xff]
      %v1073 = vld [vmem:[#allocation2 + $0x38] sm:$0xff]
      %v1074 = vld [vmem:[#allocation2 + $0x48] sm:$0xff]
      %v1075 = vld [vmem:[#allocation2 + $0x50] sm:$0xff]
      %v1076 = vld [vmem:[#allocation2 + $0x60] sm:$0xff]
      %v1077 = vld [vmem:[#allocation2 + $0x68] sm:$0xff]
      %v1078 = vld [vmem:[#allocation2 + $0x78] sm:$0xff]
      %v1079 = vld [vmem:[#allocation2 + $0x80] sm:$0xff]
      %v1080 = vld [vmem:[#allocation2 + $0x90] sm:$0xff]
      %v1081 = vld [vmem:[#allocation2 + $0x98] sm:$0xff]
      %v1082 = vld [vmem:[#allocation2 + $0xa8] sm:$0xff]
      %v1083 = vld [vmem:[#allocation2 + $0xb0] sm:$0xff]
      %v1084 = vld [vmem:[#allocation2 + $0xc0] sm:$0xff]
      %v1085 = vld [vmem:[#allocation2 + $0xc8] sm:$0xff]
      %v1086 = vld [vmem:[#allocation2 + $0xd8] sm:$0xff]
      %v1087 = vld [vmem:[#allocation2 + $0xe0] sm:$0xff]
      %v1088 = vld [vmem:[#allocation2 + $0xf0] sm:$0xff]
      %v1089 = vld [vmem:[#allocation2 + $0xf8] sm:$0xff]
      %v1090 = vld [vmem:[#allocation2 + $0x108] sm:$0xff]
      %v1091 = vld [vmem:[#allocation2 + $0x110] sm:$0xff]
      %v1092 = vld [vmem:[#allocation2 + $0x120] sm:$0xff]
      %v1093 = vld [vmem:[#allocation2 + $0x128] sm:$0xff]
      %v1094 = vld [vmem:[#allocation2 + $0x138] sm:$0xff]
      %v1095 = vld [vmem:[#allocation2 + $0x140] sm:$0xff]
      %v1096 = vld [vmem:[#allocation2 + $0x150] sm:$0xff]
      %v1097 = vld [vmem:[#allocation2 + $0x158] sm:$0xff]
      %v1098 = vld [vmem:[#allocation2 + $0x168] sm:$0xff]
      %v1099 = vld [vmem:[#allocation2 + $0x170] sm:$0xff]
      %v1100 = vlaneseq
      %v1101 = vshrl.u32 %v1100, 7
      %v1102 = vsub.s32 0, %v1101
      %v1103 = vrot.slane %v1066, %v1102
      %v1104 = vmul.f32 %v1068, %v1103
      %v1105 = vmul.f32 %v1069, %v1103
      %v1106 = vmul.f32 %v1070, %v1103
      %v1107 = vmul.f32 %v1071, %v1103
      %v1108 = vmul.f32 %v1072, %v1103
      %v1109 = vmul.f32 %v1073, %v1103
      %v1110 = vmul.f32 %v1074, %v1103
      %v1111 = vmul.f32 %v1075, %v1103
      %v1112 = vmul.f32 %v1076, %v1103
      %v1113 = vmul.f32 %v1077, %v1103
      %v1114 = vmul.f32 %v1078, %v1103
      %v1115 = vmul.f32 %v1079, %v1103
      %v1116 = vmul.f32 %v1080, %v1103
      %v1117 = vmul.f32 %v1081, %v1103
      %v1118 = vmul.f32 %v1082, %v1103
      %v1119 = vmul.f32 %v1083, %v1103
      %v1120 = vmul.f32 %v1084, %v1103
      %v1121 = vmul.f32 %v1085, %v1103
      %v1122 = vmul.f32 %v1086, %v1103
      %v1123 = vmul.f32 %v1087, %v1103
      %v1124 = vmul.f32 %v1088, %v1103
      %v1125 = vmul.f32 %v1089, %v1103
      %v1126 = vmul.f32 %v1090, %v1103
      %v1127 = vmul.f32 %v1091, %v1103
      %v1128 = vmul.f32 %v1092, %v1103
      %v1129 = vmul.f32 %v1093, %v1103
      %v1130 = vmul.f32 %v1094, %v1103
      %v1131 = vmul.f32 %v1095, %v1103
      %v1132 = vmul.f32 %v1096, %v1103
      %v1133 = vmul.f32 %v1097, %v1103
      %v1134 = vmul.f32 %v1098, %v1103
      %v1135 = vmul.f32 %v1099, %v1103
      %v1136 = vld [vmem:[#allocation2 + $0x1] sm:$0xff]
      %v1137 = vld [vmem:[#allocation2 + $0x9] sm:$0xff]
      %v1138 = vld [vmem:[#allocation2 + $0x19] sm:$0xff]
      %v1139 = vld [vmem:[#allocation2 + $0x21] sm:$0xff]
      %v1140 = vld [vmem:[#allocation2 + $0x31] sm:$0xff]
      %v1141 = vld [vmem:[#allocation2 + $0x39] sm:$0xff]
      %v1142 = vld [vmem:[#allocation2 + $0x49] sm:$0xff]
      %v1143 = vld [vmem:[#allocation2 + $0x51] sm:$0xff]
      %v1144 = vld [vmem:[#allocation2 + $0x61] sm:$0xff]
      %v1145 = vld [vmem:[#allocation2 + $0x69] sm:$0xff]
      %v1146 = vld [vmem:[#allocation2 + $0x79] sm:$0xff]
      %v1147 = vld [vmem:[#allocation2 + $0x81] sm:$0xff]
      %v1148 = vld [vmem:[#allocation2 + $0x91] sm:$0xff]
      %v1149 = vld [vmem:[#allocation2 + $0x99] sm:$0xff]
      %v1150 = vld [vmem:[#allocation2 + $0xa9] sm:$0xff]
      %v1151 = vld [vmem:[#allocation2 + $0xb1] sm:$0xff]
      %v1152 = vld [vmem:[#allocation2 + $0xc1] sm:$0xff]
      %v1153 = vld [vmem:[#allocation2 + $0xc9] sm:$0xff]
      %v1154 = vld [vmem:[#allocation2 + $0xd9] sm:$0xff]
      %v1155 = vld [vmem:[#allocation2 + $0xe1] sm:$0xff]
      %v1156 = vld [vmem:[#allocation2 + $0xf1] sm:$0xff]
      %v1157 = vld [vmem:[#allocation2 + $0xf9] sm:$0xff]
      %v1158 = vld [vmem:[#allocation2 + $0x109] sm:$0xff]
      %v1159 = vld [vmem:[#allocation2 + $0x111] sm:$0xff]
      %v1160 = vld [vmem:[#allocation2 + $0x121] sm:$0xff]
      %v1161 = vld [vmem:[#allocation2 + $0x129] sm:$0xff]
      %v1162 = vld [vmem:[#allocation2 + $0x139] sm:$0xff]
      %v1163 = vld [vmem:[#allocation2 + $0x141] sm:$0xff]
      %v1164 = vld [vmem:[#allocation2 + $0x151] sm:$0xff]
      %v1165 = vld [vmem:[#allocation2 + $0x159] sm:$0xff]
      %v1166 = vld [vmem:[#allocation2 + $0x169] sm:$0xff]
      %v1167 = vld [vmem:[#allocation2 + $0x171] sm:$0xff]
      %v1168 = vlaneseq
      %v1169 = vshrl.u32 %v1168, 7
      %v1170 = vsub.s32 1, %v1169
      %v1171 = vrot.slane %v1066, %v1170
      %v1172 = vmul.f32 %v1136, %v1171
      %v1173 = vmul.f32 %v1137, %v1171
      %v1174 = vmul.f32 %v1138, %v1171
      %v1175 = vmul.f32 %v1139, %v1171
      %v1176 = vmul.f32 %v1140, %v1171
      %v1177 = vmul.f32 %v1141, %v1171
      %v1178 = vmul.f32 %v1142, %v1171
      %v1179 = vmul.f32 %v1143, %v1171
      %v1180 = vmul.f32 %v1144, %v1171
      %v1181 = vmul.f32 %v1145, %v1171
      %v1182 = vmul.f32 %v1146, %v1171
      %v1183 = vmul.f32 %v1147, %v1171
      %v1184 = vmul.f32 %v1148, %v1171
      %v1185 = vmul.f32 %v1149, %v1171
      %v1186 = vmul.f32 %v1150, %v1171
      %v1187 = vmul.f32 %v1151, %v1171
      %v1188 = vmul.f32 %v1152, %v1171
      %v1189 = vmul.f32 %v1153, %v1171
      %v1190 = vmul.f32 %v1154, %v1171
      %v1191 = vmul.f32 %v1155, %v1171
      %v1192 = vmul.f32 %v1156, %v1171
      %v1193 = vmul.f32 %v1157, %v1171
      %v1194 = vmul.f32 %v1158, %v1171
      %v1195 = vmul.f32 %v1159, %v1171
      %v1196 = vmul.f32 %v1160, %v1171
      %v1197 = vmul.f32 %v1161, %v1171
      %v1198 = vmul.f32 %v1162, %v1171
      %v1199 = vmul.f32 %v1163, %v1171
      %v1200 = vmul.f32 %v1164, %v1171
      %v1201 = vmul.f32 %v1165, %v1171
      %v1202 = vmul.f32 %v1166, %v1171
      %v1203 = vmul.f32 %v1167, %v1171
      %v1204 = vadd.f32 %v1104, %v1172
      %v1205 = vadd.f32 %v1105, %v1173
      %v1206 = vadd.f32 %v1106, %v1174
      %v1207 = vadd.f32 %v1107, %v1175
      %v1208 = vadd.f32 %v1108, %v1176
      %v1209 = vadd.f32 %v1109, %v1177
      %v1210 = vadd.f32 %v1110, %v1178
      %v1211 = vadd.f32 %v1111, %v1179
      %v1212 = vadd.f32 %v1112, %v1180
      %v1213 = vadd.f32 %v1113, %v1181
      %v1214 = vadd.f32 %v1114, %v1182
      %v1215 = vadd.f32 %v1115, %v1183
      %v1216 = vadd.f32 %v1116, %v1184
      %v1217 = vadd.f32 %v1117, %v1185
      %v1218 = vadd.f32 %v1118, %v1186
      %v1219 = vadd.f32 %v1119, %v1187
      %v1220 = vadd.f32 %v1120, %v1188
      %v1221 = vadd.f32 %v1121, %v1189
      %v1222 = vadd.f32 %v1122, %v1190
      %v1223 = vadd.f32 %v1123, %v1191
      %v1224 = vadd.f32 %v1124, %v1192
      %v1225 = vadd.f32 %v1125, %v1193
      %v1226 = vadd.f32 %v1126, %v1194
      %v1227 = vadd.f32 %v1127, %v1195
      %v1228 = vadd.f32 %v1128, %v1196
      %v1229 = vadd.f32 %v1129, %v1197
      %v1230 = vadd.f32 %v1130, %v1198
      %v1231 = vadd.f32 %v1131, %v1199
      %v1232 = vadd.f32 %v1132, %v1200
      %v1233 = vadd.f32 %v1133, %v1201
      %v1234 = vadd.f32 %v1134, %v1202
      %v1235 = vadd.f32 %v1135, %v1203
      %v1236 = vld [vmem:[#allocation2 + $0x2] sm:$0xff]
      %v1237 = vld [vmem:[#allocation2 + $0xa] sm:$0xff]
      %v1238 = vld [vmem:[#allocation2 + $0x1a] sm:$0xff]
      %v1239 = vld [vmem:[#allocation2 + $0x22] sm:$0xff]
      %v1240 = vld [vmem:[#allocation2 + $0x32] sm:$0xff]
      %v1241 = vld [vmem:[#allocation2 + $0x3a] sm:$0xff]
      %v1242 = vld [vmem:[#allocation2 + $0x4a] sm:$0xff]
      %v1243 = vld [vmem:[#allocation2 + $0x52] sm:$0xff]
      %v1244 = vld [vmem:[#allocation2 + $0x62] sm:$0xff]
      %v1245 = vld [vmem:[#allocation2 + $0x6a] sm:$0xff]
      %v1246 = vld [vmem:[#allocation2 + $0x7a] sm:$0xff]
      %v1247 = vld [vmem:[#allocation2 + $0x82] sm:$0xff]
      %v1248 = vld [vmem:[#allocation2 + $0x92] sm:$0xff]
      %v1249 = vld [vmem:[#allocation2 + $0x9a] sm:$0xff]
      %v1250 = vld [vmem:[#allocation2 + $0xaa] sm:$0xff]
      %v1251 = vld [vmem:[#allocation2 + $0xb2] sm:$0xff]
      %v1252 = vld [vmem:[#allocation2 + $0xc2] sm:$0xff]
      %v1253 = vld [vmem:[#allocation2 + $0xca] sm:$0xff]
      %v1254 = vld [vmem:[#allocation2 + $0xda] sm:$0xff]
      %v1255 = vld [vmem:[#allocation2 + $0xe2] sm:$0xff]
      %v1256 = vld [vmem:[#allocation2 + $0xf2] sm:$0xff]
      %v1257 = vld [vmem:[#allocation2 + $0xfa] sm:$0xff]
      %v1258 = vld [vmem:[#allocation2 + $0x10a] sm:$0xff]
      %v1259 = vld [vmem:[#allocation2 + $0x112] sm:$0xff]
      %v1260 = vld [vmem:[#allocation2 + $0x122] sm:$0xff]
      %v1261 = vld [vmem:[#allocation2 + $0x12a] sm:$0xff]
      %v1262 = vld [vmem:[#allocation2 + $0x13a] sm:$0xff]
      %v1263 = vld [vmem:[#allocation2 + $0x142] sm:$0xff]
      %v1264 = vld [vmem:[#allocation2 + $0x152] sm:$0xff]
      %v1265 = vld [vmem:[#allocation2 + $0x15a] sm:$0xff]
      %v1266 = vld [vmem:[#allocation2 + $0x16a] sm:$0xff]
      %v1267 = vld [vmem:[#allocation2 + $0x172] sm:$0xff]
      %v1268 = vlaneseq
      %v1269 = vshrl.u32 %v1268, 7
      %v1270 = vsub.s32 2, %v1269
      %v1271 = vrot.slane %v1066, %v1270
      %v1272 = vmul.f32 %v1236, %v1271
      %v1273 = vmul.f32 %v1237, %v1271
      %v1274 = vmul.f32 %v1238, %v1271
      %v1275 = vmul.f32 %v1239, %v1271
      %v1276 = vmul.f32 %v1240, %v1271
      %v1277 = vmul.f32 %v1241, %v1271
      %v1278 = vmul.f32 %v1242, %v1271
      %v1279 = vmul.f32 %v1243, %v1271
      %v1280 = vmul.f32 %v1244, %v1271
      %v1281 = vmul.f32 %v1245, %v1271
      %v1282 = vmul.f32 %v1246, %v1271
      %v1283 = vmul.f32 %v1247, %v1271
      %v1284 = vmul.f32 %v1248, %v1271
      %v1285 = vmul.f32 %v1249, %v1271
      %v1286 = vmul.f32 %v1250, %v1271
      %v1287 = vmul.f32 %v1251, %v1271
      %v1288 = vmul.f32 %v1252, %v1271
      %v1289 = vmul.f32 %v1253, %v1271
      %v1290 = vmul.f32 %v1254, %v1271
      %v1291 = vmul.f32 %v1255, %v1271
      %v1292 = vmul.f32 %v1256, %v1271
      %v1293 = vmul.f32 %v1257, %v1271
      %v1294 = vmul.f32 %v1258, %v1271
      %v1295 = vmul.f32 %v1259, %v1271
      %v1296 = vmul.f32 %v1260, %v1271
      %v1297 = vmul.f32 %v1261, %v1271
      %v1298 = vmul.f32 %v1262, %v1271
      %v1299 = vmul.f32 %v1263, %v1271
      %v1300 = vmul.f32 %v1264, %v1271
      %v1301 = vmul.f32 %v1265, %v1271
      %v1302 = vmul.f32 %v1266, %v1271
      %v1303 = vmul.f32 %v1267, %v1271
      %v1304 = vadd.f32 %v1204, %v1272
      %v1305 = vadd.f32 %v1205, %v1273
      %v1306 = vadd.f32 %v1206, %v1274
      %v1307 = vadd.f32 %v1207, %v1275
      %v1308 = vadd.f32 %v1208, %v1276
      %v1309 = vadd.f32 %v1209, %v1277
      %v1310 = vadd.f32 %v1210, %v1278
      %v1311 = vadd.f32 %v1211, %v1279
      %v1312 = vadd.f32 %v1212, %v1280
      %v1313 = vadd.f32 %v1213, %v1281
      %v1314 = vadd.f32 %v1214, %v1282
      %v1315 = vadd.f32 %v1215, %v1283
      %v1316 = vadd.f32 %v1216, %v1284
      %v1317 = vadd.f32 %v1217, %v1285
      %v1318 = vadd.f32 %v1218, %v1286
      %v1319 = vadd.f32 %v1219, %v1287
      %v1320 = vadd.f32 %v1220, %v1288
      %v1321 = vadd.f32 %v1221, %v1289
      %v1322 = vadd.f32 %v1222, %v1290
      %v1323 = vadd.f32 %v1223, %v1291
      %v1324 = vadd.f32 %v1224, %v1292
      %v1325 = vadd.f32 %v1225, %v1293
      %v1326 = vadd.f32 %v1226, %v1294
      %v1327 = vadd.f32 %v1227, %v1295
      %v1328 = vadd.f32 %v1228, %v1296
      %v1329 = vadd.f32 %v1229, %v1297
      %v1330 = vadd.f32 %v1230, %v1298
      %v1331 = vadd.f32 %v1231, %v1299
      %v1332 = vadd.f32 %v1232, %v1300
      %v1333 = vadd.f32 %v1233, %v1301
      %v1334 = vadd.f32 %v1234, %v1302
      %v1335 = vadd.f32 %v1235, %v1303
      %v1336 = vld [vmem:[%s871] sm:$0xff]
      %v1337 = vld [vmem:[%s871 + $0x8] sm:$0xff]
      %v1338 = vld [vmem:[%s871 + $0x18] sm:$0xff]
      %v1339 = vld [vmem:[%s871 + $0x20] sm:$0xff]
      %v1340 = vld [vmem:[%s871 + $0x30] sm:$0xff]
      %v1341 = vld [vmem:[%s871 + $0x38] sm:$0xff]
      %v1342 = vld [vmem:[%s871 + $0x48] sm:$0xff]
      %v1343 = vld [vmem:[%s871 + $0x50] sm:$0xff]
      %v1344 = vld [vmem:[%s871 + $0x60] sm:$0xff]
      %v1345 = vld [vmem:[%s871 + $0x68] sm:$0xff]
      %v1346 = vld [vmem:[%s871 + $0x78] sm:$0xff]
      %v1347 = vld [vmem:[%s871 + $0x80] sm:$0xff]
      %v1348 = vld [vmem:[%s871 + $0x90] sm:$0xff]
      %v1349 = vld [vmem:[%s871 + $0x98] sm:$0xff]
      %v1350 = vld [vmem:[%s871 + $0xa8] sm:$0xff]
      %v1351 = vld [vmem:[%s871 + $0xb0] sm:$0xff]
      %v1352 = vld [vmem:[%s871 + $0xc0] sm:$0xff]
      %v1353 = vld [vmem:[%s871 + $0xc8] sm:$0xff]
      %v1354 = vld [vmem:[%s871 + $0xd8] sm:$0xff]
      %v1355 = vld [vmem:[%s871 + $0xe0] sm:$0xff]
      %v1356 = vld [vmem:[%s871 + $0xf0] sm:$0xff]
      %v1357 = vld [vmem:[%s871 + $0xf8] sm:$0xff]
      %v1358 = vld [vmem:[%s871 + $0x108] sm:$0xff]
      %v1359 = vld [vmem:[%s871 + $0x110] sm:$0xff]
      %v1360 = vld [vmem:[%s871 + $0x120] sm:$0xff]
      %v1361 = vld [vmem:[%s871 + $0x128] sm:$0xff]
      %v1362 = vld [vmem:[%s871 + $0x138] sm:$0xff]
      %v1363 = vld [vmem:[%s871 + $0x140] sm:$0xff]
      %v1364 = vld [vmem:[%s871 + $0x150] sm:$0xff]
      %v1365 = vld [vmem:[%s871 + $0x158] sm:$0xff]
      %v1366 = vld [vmem:[%s871 + $0x168] sm:$0xff]
      %v1367 = vld [vmem:[%s871 + $0x170] sm:$0xff]
      %v1368 = vlaneseq
      %v1369 = vshrl.u32 %v1368, 7
      %v1370 = vsub.s32 3, %v1369
      %v1371 = vrot.slane %v1066, %v1370
      %v1372 = vmul.f32 %v1336, %v1371
      %v1373 = vmul.f32 %v1337, %v1371
      %v1374 = vmul.f32 %v1338, %v1371
      %v1375 = vmul.f32 %v1339, %v1371
      %v1376 = vmul.f32 %v1340, %v1371
      %v1377 = vmul.f32 %v1341, %v1371
      %v1378 = vmul.f32 %v1342, %v1371
      %v1379 = vmul.f32 %v1343, %v1371
      %v1380 = vmul.f32 %v1344, %v1371
      %v1381 = vmul.f32 %v1345, %v1371
      %v1382 = vmul.f32 %v1346, %v1371
      %v1383 = vmul.f32 %v1347, %v1371
      %v1384 = vmul.f32 %v1348, %v1371
      %v1385 = vmul.f32 %v1349, %v1371
      %v1386 = vmul.f32 %v1350, %v1371
      %v1387 = vmul.f32 %v1351, %v1371
      %v1388 = vmul.f32 %v1352, %v1371
      %v1389 = vmul.f32 %v1353, %v1371
      %v1390 = vmul.f32 %v1354, %v1371
      %v1391 = vmul.f32 %v1355, %v1371
      %v1392 = vmul.f32 %v1356, %v1371
      %v1393 = vmul.f32 %v1357, %v1371
      %v1394 = vmul.f32 %v1358, %v1371
      %v1395 = vmul.f32 %v1359, %v1371
      %v1396 = vmul.f32 %v1360, %v1371
      %v1397 = vmul.f32 %v1361, %v1371
      %v1398 = vmul.f32 %v1362, %v1371
      %v1399 = vmul.f32 %v1363, %v1371
      %v1400 = vmul.f32 %v1364, %v1371
      %v1401 = vmul.f32 %v1365, %v1371
      %v1402 = vmul.f32 %v1366, %v1371
      %v1403 = vmul.f32 %v1367, %v1371
      %v1404 = vadd.f32 %v1304, %v1372
      %v1405 = vadd.f32 %v1305, %v1373
      %v1406 = vadd.f32 %v1306, %v1374
      %v1407 = vadd.f32 %v1307, %v1375
      %v1408 = vadd.f32 %v1308, %v1376
      %v1409 = vadd.f32 %v1309, %v1377
      %v1410 = vadd.f32 %v1310, %v1378
      %v1411 = vadd.f32 %v1311, %v1379
      %v1412 = vadd.f32 %v1312, %v1380
      %v1413 = vadd.f32 %v1313, %v1381
      %v1414 = vadd.f32 %v1314, %v1382
      %v1415 = vadd.f32 %v1315, %v1383
      %v1416 = vadd.f32 %v1316, %v1384
      %v1417 = vadd.f32 %v1317, %v1385
      %v1418 = vadd.f32 %v1318, %v1386
      %v1419 = vadd.f32 %v1319, %v1387
      %v1420 = vadd.f32 %v1320, %v1388
      %v1421 = vadd.f32 %v1321, %v1389
      %v1422 = vadd.f32 %v1322, %v1390
      %v1423 = vadd.f32 %v1323, %v1391
      %v1424 = vadd.f32 %v1324, %v1392
      %v1425 = vadd.f32 %v1325, %v1393
      %v1426 = vadd.f32 %v1326, %v1394
      %v1427 = vadd.f32 %v1327, %v1395
      %v1428 = vadd.f32 %v1328, %v1396
      %v1429 = vadd.f32 %v1329, %v1397
      %v1430 = vadd.f32 %v1330, %v1398
      %v1431 = vadd.f32 %v1331, %v1399
      %v1432 = vadd.f32 %v1332, %v1400
      %v1433 = vadd.f32 %v1333, %v1401
      %v1434 = vadd.f32 %v1334, %v1402
      %v1435 = vadd.f32 %v1335, %v1403
      %v1436 = vld [vmem:[%s871 + $0x1] sm:$0xff]
      %v1437 = vld [vmem:[%s871 + $0x9] sm:$0xff]
      %v1438 = vld [vmem:[%s871 + $0x19] sm:$0xff]
      %v1439 = vld [vmem:[%s871 + $0x21] sm:$0xff]
      %v1440 = vld [vmem:[%s871 + $0x31] sm:$0xff]
      %v1441 = vld [vmem:[%s871 + $0x39] sm:$0xff]
      %v1442 = vld [vmem:[%s871 + $0x49] sm:$0xff]
      %v1443 = vld [vmem:[%s871 + $0x51] sm:$0xff]
      %v1444 = vld [vmem:[%s871 + $0x61] sm:$0xff]
      %v1445 = vld [vmem:[%s871 + $0x69] sm:$0xff]
      %v1446 = vld [vmem:[%s871 + $0x79] sm:$0xff]
      %v1447 = vld [vmem:[%s871 + $0x81] sm:$0xff]
      %v1448 = vld [vmem:[%s871 + $0x91] sm:$0xff]
      %v1449 = vld [vmem:[%s871 + $0x99] sm:$0xff]
      %v1450 = vld [vmem:[%s871 + $0xa9] sm:$0xff]
      %v1451 = vld [vmem:[%s871 + $0xb1] sm:$0xff]
      %v1452 = vld [vmem:[%s871 + $0xc1] sm:$0xff]
      %v1453 = vld [vmem:[%s871 + $0xc9] sm:$0xff]
      %v1454 = vld [vmem:[%s871 + $0xd9] sm:$0xff]
      %v1455 = vld [vmem:[%s871 + $0xe1] sm:$0xff]
      %v1456 = vld [vmem:[%s871 + $0xf1] sm:$0xff]
      %v1457 = vld [vmem:[%s871 + $0xf9] sm:$0xff]
      %v1458 = vld [vmem:[%s871 + $0x109] sm:$0xff]
      %v1459 = vld [vmem:[%s871 + $0x111] sm:$0xff]
      %v1460 = vld [vmem:[%s871 + $0x121] sm:$0xff]
      %v1461 = vld [vmem:[%s871 + $0x129] sm:$0xff]
      %v1462 = vld [vmem:[%s871 + $0x139] sm:$0xff]
      %v1463 = vld [vmem:[%s871 + $0x141] sm:$0xff]
      %v1464 = vld [vmem:[%s871 + $0x151] sm:$0xff]
      %v1465 = vld [vmem:[%s871 + $0x159] sm:$0xff]
      %v1466 = vld [vmem:[%s871 + $0x169] sm:$0xff]
      %v1467 = vld [vmem:[%s871 + $0x171] sm:$0xff]
      %v1468 = vlaneseq
      %v1469 = vshrl.u32 %v1468, 7
      %v1470 = vsub.s32 4, %v1469
      %v1471 = vrot.slane %v1066, %v1470
      %v1472 = vmul.f32 %v1436, %v1471
      %v1473 = vmul.f32 %v1437, %v1471
      %v1474 = vmul.f32 %v1438, %v1471
      %v1475 = vmul.f32 %v1439, %v1471
      %v1476 = vmul.f32 %v1440, %v1471
      %v1477 = vmul.f32 %v1441, %v1471
      %v1478 = vmul.f32 %v1442, %v1471
      %v1479 = vmul.f32 %v1443, %v1471
      %v1480 = vmul.f32 %v1444, %v1471
      %v1481 = vmul.f32 %v1445, %v1471
      %v1482 = vmul.f32 %v1446, %v1471
      %v1483 = vmul.f32 %v1447, %v1471
      %v1484 = vmul.f32 %v1448, %v1471
      %v1485 = vmul.f32 %v1449, %v1471
      %v1486 = vmul.f32 %v1450, %v1471
      %v1487 = vmul.f32 %v1451, %v1471
      %v1488 = vmul.f32 %v1452, %v1471
      %v1489 = vmul.f32 %v1453, %v1471
      %v1490 = vmul.f32 %v1454, %v1471
      %v1491 = vmul.f32 %v1455, %v1471
      %v1492 = vmul.f32 %v1456, %v1471
      %v1493 = vmul.f32 %v1457, %v1471
      %v1494 = vmul.f32 %v1458, %v1471
      %v1495 = vmul.f32 %v1459, %v1471
      %v1496 = vmul.f32 %v1460, %v1471
      %v1497 = vmul.f32 %v1461, %v1471
      %v1498 = vmul.f32 %v1462, %v1471
      %v1499 = vmul.f32 %v1463, %v1471
      %v1500 = vmul.f32 %v1464, %v1471
      %v1501 = vmul.f32 %v1465, %v1471
      %v1502 = vmul.f32 %v1466, %v1471
      %v1503 = vmul.f32 %v1467, %v1471
      %v1504 = vadd.f32 %v1404, %v1472
      %v1505 = vadd.f32 %v1405, %v1473
      %v1506 = vadd.f32 %v1406, %v1474
      %v1507 = vadd.f32 %v1407, %v1475
      %v1508 = vadd.f32 %v1408, %v1476
      %v1509 = vadd.f32 %v1409, %v1477
      %v1510 = vadd.f32 %v1410, %v1478
      %v1511 = vadd.f32 %v1411, %v1479
      %v1512 = vadd.f32 %v1412, %v1480
      %v1513 = vadd.f32 %v1413, %v1481
      %v1514 = vadd.f32 %v1414, %v1482
      %v1515 = vadd.f32 %v1415, %v1483
      %v1516 = vadd.f32 %v1416, %v1484
      %v1517 = vadd.f32 %v1417, %v1485
      %v1518 = vadd.f32 %v1418, %v1486
      %v1519 = vadd.f32 %v1419, %v1487
      %v1520 = vadd.f32 %v1420, %v1488
      %v1521 = vadd.f32 %v1421, %v1489
      %v1522 = vadd.f32 %v1422, %v1490
      %v1523 = vadd.f32 %v1423, %v1491
      %v1524 = vadd.f32 %v1424, %v1492
      %v1525 = vadd.f32 %v1425, %v1493
      %v1526 = vadd.f32 %v1426, %v1494
      %v1527 = vadd.f32 %v1427, %v1495
      %v1528 = vadd.f32 %v1428, %v1496
      %v1529 = vadd.f32 %v1429, %v1497
      %v1530 = vadd.f32 %v1430, %v1498
      %v1531 = vadd.f32 %v1431, %v1499
      %v1532 = vadd.f32 %v1432, %v1500
      %v1533 = vadd.f32 %v1433, %v1501
      %v1534 = vadd.f32 %v1434, %v1502
      %v1535 = vadd.f32 %v1435, %v1503
      %v1536 = vld [vmem:[%s871 + $0x2] sm:$0xff]
      %v1537 = vld [vmem:[%s871 + $0xa] sm:$0xff]
      %v1538 = vld [vmem:[%s871 + $0x1a] sm:$0xff]
      %v1539 = vld [vmem:[%s871 + $0x22] sm:$0xff]
      %v1540 = vld [vmem:[%s871 + $0x32] sm:$0xff]
      %v1541 = vld [vmem:[%s871 + $0x3a] sm:$0xff]
      %v1542 = vld [vmem:[%s871 + $0x4a] sm:$0xff]
      %v1543 = vld [vmem:[%s871 + $0x52] sm:$0xff]
      %v1544 = vld [vmem:[%s871 + $0x62] sm:$0xff]
      %v1545 = vld [vmem:[%s871 + $0x6a] sm:$0xff]
      %v1546 = vld [vmem:[%s871 + $0x7a] sm:$0xff]
      %v1547 = vld [vmem:[%s871 + $0x82] sm:$0xff]
      %v1548 = vld [vmem:[%s871 + $0x92] sm:$0xff]
      %v1549 = vld [vmem:[%s871 + $0x9a] sm:$0xff]
      %v1550 = vld [vmem:[%s871 + $0xaa] sm:$0xff]
      %v1551 = vld [vmem:[%s871 + $0xb2] sm:$0xff]
      %v1552 = vld [vmem:[%s871 + $0xc2] sm:$0xff]
      %v1553 = vld [vmem:[%s871 + $0xca] sm:$0xff]
      %v1554 = vld [vmem:[%s871 + $0xda] sm:$0xff]
      %v1555 = vld [vmem:[%s871 + $0xe2] sm:$0xff]
      %v1556 = vld [vmem:[%s871 + $0xf2] sm:$0xff]
      %v1557 = vld [vmem:[%s871 + $0xfa] sm:$0xff]
      %v1558 = vld [vmem:[%s871 + $0x10a] sm:$0xff]
      %v1559 = vld [vmem:[%s871 + $0x112] sm:$0xff]
      %v1560 = vld [vmem:[%s871 + $0x122] sm:$0xff]
      %v1561 = vld [vmem:[%s871 + $0x12a] sm:$0xff]
      %v1562 = vld [vmem:[%s871 + $0x13a] sm:$0xff]
      %v1563 = vld [vmem:[%s871 + $0x142] sm:$0xff]
      %v1564 = vld [vmem:[%s871 + $0x152] sm:$0xff]
      %v1565 = vld [vmem:[%s871 + $0x15a] sm:$0xff]
      %v1566 = vld [vmem:[%s871 + $0x16a] sm:$0xff]
      %v1567 = vld [vmem:[%s871 + $0x172] sm:$0xff]
      %v1568 = vlaneseq
      %v1569 = vshrl.u32 %v1568, 7
      %v1570 = vsub.s32 5, %v1569
      %v1571 = vrot.slane %v1066, %v1570
      %v1572 = vmul.f32 %v1536, %v1571
      %v1573 = vmul.f32 %v1537, %v1571
      %v1574 = vmul.f32 %v1538, %v1571
      %v1575 = vmul.f32 %v1539, %v1571
      %v1576 = vmul.f32 %v1540, %v1571
      %v1577 = vmul.f32 %v1541, %v1571
      %v1578 = vmul.f32 %v1542, %v1571
      %v1579 = vmul.f32 %v1543, %v1571
      %v1580 = vmul.f32 %v1544, %v1571
      %v1581 = vmul.f32 %v1545, %v1571
      %v1582 = vmul.f32 %v1546, %v1571
      %v1583 = vmul.f32 %v1547, %v1571
      %v1584 = vmul.f32 %v1548, %v1571
      %v1585 = vmul.f32 %v1549, %v1571
      %v1586 = vmul.f32 %v1550, %v1571
      %v1587 = vmul.f32 %v1551, %v1571
      %v1588 = vmul.f32 %v1552, %v1571
      %v1589 = vmul.f32 %v1553, %v1571
      %v1590 = vmul.f32 %v1554, %v1571
      %v1591 = vmul.f32 %v1555, %v1571
      %v1592 = vmul.f32 %v1556, %v1571
      %v1593 = vmul.f32 %v1557, %v1571
      %v1594 = vmul.f32 %v1558, %v1571
      %v1595 = vmul.f32 %v1559, %v1571
      %v1596 = vmul.f32 %v1560, %v1571
      %v1597 = vmul.f32 %v1561, %v1571
      %v1598 = vmul.f32 %v1562, %v1571
      %v1599 = vmul.f32 %v1563, %v1571
      %v1600 = vmul.f32 %v1564, %v1571
      %v1601 = vmul.f32 %v1565, %v1571
      %v1602 = vmul.f32 %v1566, %v1571
      %v1603 = vmul.f32 %v1567, %v1571
      %v1604 = vadd.f32 %v1504, %v1572
      %v1605 = vadd.f32 %v1505, %v1573
      %v1606 = vadd.f32 %v1506, %v1574
      %v1607 = vadd.f32 %v1507, %v1575
      %v1608 = vadd.f32 %v1508, %v1576
      %v1609 = vadd.f32 %v1509, %v1577
      %v1610 = vadd.f32 %v1510, %v1578
      %v1611 = vadd.f32 %v1511, %v1579
      %v1612 = vadd.f32 %v1512, %v1580
      %v1613 = vadd.f32 %v1513, %v1581
      %v1614 = vadd.f32 %v1514, %v1582
      %v1615 = vadd.f32 %v1515, %v1583
      %v1616 = vadd.f32 %v1516, %v1584
      %v1617 = vadd.f32 %v1517, %v1585
      %v1618 = vadd.f32 %v1518, %v1586
      %v1619 = vadd.f32 %v1519, %v1587
      %v1620 = vadd.f32 %v1520, %v1588
      %v1621 = vadd.f32 %v1521, %v1589
      %v1622 = vadd.f32 %v1522, %v1590
      %v1623 = vadd.f32 %v1523, %v1591
      %v1624 = vadd.f32 %v1524, %v1592
      %v1625 = vadd.f32 %v1525, %v1593
      %v1626 = vadd.f32 %v1526, %v1594
      %v1627 = vadd.f32 %v1527, %v1595
      %v1628 = vadd.f32 %v1528, %v1596
      %v1629 = vadd.f32 %v1529, %v1597
      %v1630 = vadd.f32 %v1530, %v1598
      %v1631 = vadd.f32 %v1531, %v1599
      %v1632 = vadd.f32 %v1532, %v1600
      %v1633 = vadd.f32 %v1533, %v1601
      %v1634 = vadd.f32 %v1534, %v1602
      %v1635 = vadd.f32 %v1535, %v1603
      %s1636 = scalar_lea.vmem [#allocation2], 48
      %v1637 = vld [vmem:[%s1636] sm:$0xff]
      %v1638 = vld [vmem:[%s1636 + $0x8] sm:$0xff]
      %v1639 = vld [vmem:[%s1636 + $0x18] sm:$0xff]
      %v1640 = vld [vmem:[%s1636 + $0x20] sm:$0xff]
      %v1641 = vld [vmem:[%s1636 + $0x30] sm:$0xff]
      %v1642 = vld [vmem:[%s1636 + $0x38] sm:$0xff]
      %v1643 = vld [vmem:[%s1636 + $0x48] sm:$0xff]
      %v1644 = vld [vmem:[%s1636 + $0x50] sm:$0xff]
      %v1645 = vld [vmem:[%s1636 + $0x60] sm:$0xff]
      %v1646 = vld [vmem:[%s1636 + $0x68] sm:$0xff]
      %v1647 = vld [vmem:[%s1636 + $0x78] sm:$0xff]
      %v1648 = vld [vmem:[%s1636 + $0x80] sm:$0xff]
      %v1649 = vld [vmem:[%s1636 + $0x90] sm:$0xff]
      %v1650 = vld [vmem:[%s1636 + $0x98] sm:$0xff]
      %v1651 = vld [vmem:[%s1636 + $0xa8] sm:$0xff]
      %v1652 = vld [vmem:[%s1636 + $0xb0] sm:$0xff]
      %v1653 = vld [vmem:[%s1636 + $0xc0] sm:$0xff]
      %v1654 = vld [vmem:[%s1636 + $0xc8] sm:$0xff]
      %v1655 = vld [vmem:[%s1636 + $0xd8] sm:$0xff]
      %v1656 = vld [vmem:[%s1636 + $0xe0] sm:$0xff]
      %v1657 = vld [vmem:[%s1636 + $0xf0] sm:$0xff]
      %v1658 = vld [vmem:[%s1636 + $0xf8] sm:$0xff]
      %v1659 = vld [vmem:[%s1636 + $0x108] sm:$0xff]
      %v1660 = vld [vmem:[%s1636 + $0x110] sm:$0xff]
      %v1661 = vld [vmem:[%s1636 + $0x120] sm:$0xff]
      %v1662 = vld [vmem:[%s1636 + $0x128] sm:$0xff]
      %v1663 = vld [vmem:[%s1636 + $0x138] sm:$0xff]
      %v1664 = vld [vmem:[%s1636 + $0x140] sm:$0xff]
      %v1665 = vld [vmem:[%s1636 + $0x150] sm:$0xff]
      %v1666 = vld [vmem:[%s1636 + $0x158] sm:$0xff]
      %v1667 = vld [vmem:[%s1636 + $0x168] sm:$0xff]
      %v1668 = vld [vmem:[%s1636 + $0x170] sm:$0xff]
      %v1669 = vlaneseq
      %v1670 = vshrl.u32 %v1669, 7
      %v1671 = vsub.s32 6, %v1670
      %v1672 = vrot.slane %v1066, %v1671
      %v1673 = vmul.f32 %v1637, %v1672
      %v1674 = vmul.f32 %v1638, %v1672
      %v1675 = vmul.f32 %v1639, %v1672
      %v1676 = vmul.f32 %v1640, %v1672
      %v1677 = vmul.f32 %v1641, %v1672
      %v1678 = vmul.f32 %v1642, %v1672
      %v1679 = vmul.f32 %v1643, %v1672
      %v1680 = vmul.f32 %v1644, %v1672
      %v1681 = vmul.f32 %v1645, %v1672
      %v1682 = vmul.f32 %v1646, %v1672
      %v1683 = vmul.f32 %v1647, %v1672
      %v1684 = vmul.f32 %v1648, %v1672
      %v1685 = vmul.f32 %v1649, %v1672
      %v1686 = vmul.f32 %v1650, %v1672
      %v1687 = vmul.f32 %v1651, %v1672
      %v1688 = vmul.f32 %v1652, %v1672
      %v1689 = vmul.f32 %v1653, %v1672
      %v1690 = vmul.f32 %v1654, %v1672
      %v1691 = vmul.f32 %v1655, %v1672
      %v1692 = vmul.f32 %v1656, %v1672
      %v1693 = vmul.f32 %v1657, %v1672
      %v1694 = vmul.f32 %v1658, %v1672
      %v1695 = vmul.f32 %v1659, %v1672
      %v1696 = vmul.f32 %v1660, %v1672
      %v1697 = vmul.f32 %v1661, %v1672
      %v1698 = vmul.f32 %v1662, %v1672
      %v1699 = vmul.f32 %v1663, %v1672
      %v1700 = vmul.f32 %v1664, %v1672
      %v1701 = vmul.f32 %v1665, %v1672
      %v1702 = vmul.f32 %v1666, %v1672
      %v1703 = vmul.f32 %v1667, %v1672
      %v1704 = vmul.f32 %v1668, %v1672
      %v1705 = vadd.f32 %v1604, %v1673
      %v1706 = vadd.f32 %v1605, %v1674
      %v1707 = vadd.f32 %v1606, %v1675
      %v1708 = vadd.f32 %v1607, %v1676
      %v1709 = vadd.f32 %v1608, %v1677
      %v1710 = vadd.f32 %v1609, %v1678
      %v1711 = vadd.f32 %v1610, %v1679
      %v1712 = vadd.f32 %v1611, %v1680
      %v1713 = vadd.f32 %v1612, %v1681
      %v1714 = vadd.f32 %v1613, %v1682
      %v1715 = vadd.f32 %v1614, %v1683
      %v1716 = vadd.f32 %v1615, %v1684
      %v1717 = vadd.f32 %v1616, %v1685
      %v1718 = vadd.f32 %v1617, %v1686
      %v1719 = vadd.f32 %v1618, %v1687
      %v1720 = vadd.f32 %v1619, %v1688
      %v1721 = vadd.f32 %v1620, %v1689
      %v1722 = vadd.f32 %v1621, %v1690
      %v1723 = vadd.f32 %v1622, %v1691
      %v1724 = vadd.f32 %v1623, %v1692
      %v1725 = vadd.f32 %v1624, %v1693
      %v1726 = vadd.f32 %v1625, %v1694
      %v1727 = vadd.f32 %v1626, %v1695
      %v1728 = vadd.f32 %v1627, %v1696
      %v1729 = vadd.f32 %v1628, %v1697
      %v1730 = vadd.f32 %v1629, %v1698
      %v1731 = vadd.f32 %v1630, %v1699
      %v1732 = vadd.f32 %v1631, %v1700
      %v1733 = vadd.f32 %v1632, %v1701
      %v1734 = vadd.f32 %v1633, %v1702
      %v1735 = vadd.f32 %v1634, %v1703
      %v1736 = vadd.f32 %v1635, %v1704
      %v1737 = vld [vmem:[%s1636 + $0x1] sm:$0xff]
      %v1738 = vld [vmem:[%s1636 + $0x9] sm:$0xff]
      %v1739 = vld [vmem:[%s1636 + $0x19] sm:$0xff]
      %v1740 = vld [vmem:[%s1636 + $0x21] sm:$0xff]
      %v1741 = vld [vmem:[%s1636 + $0x31] sm:$0xff]
      %v1742 = vld [vmem:[%s1636 + $0x39] sm:$0xff]
      %v1743 = vld [vmem:[%s1636 + $0x49] sm:$0xff]
      %v1744 = vld [vmem:[%s1636 + $0x51] sm:$0xff]
      %v1745 = vld [vmem:[%s1636 + $0x61] sm:$0xff]
      %v1746 = vld [vmem:[%s1636 + $0x69] sm:$0xff]
      %v1747 = vld [vmem:[%s1636 + $0x79] sm:$0xff]
      %v1748 = vld [vmem:[%s1636 + $0x81] sm:$0xff]
      %v1749 = vld [vmem:[%s1636 + $0x91] sm:$0xff]
      %v1750 = vld [vmem:[%s1636 + $0x99] sm:$0xff]
      %v1751 = vld [vmem:[%s1636 + $0xa9] sm:$0xff]
      %v1752 = vld [vmem:[%s1636 + $0xb1] sm:$0xff]
      %v1753 = vld [vmem:[%s1636 + $0xc1] sm:$0xff]
      %v1754 = vld [vmem:[%s1636 + $0xc9] sm:$0xff]
      %v1755 = vld [vmem:[%s1636 + $0xd9] sm:$0xff]
      %v1756 = vld [vmem:[%s1636 + $0xe1] sm:$0xff]
      %v1757 = vld [vmem:[%s1636 + $0xf1] sm:$0xff]
      %v1758 = vld [vmem:[%s1636 + $0xf9] sm:$0xff]
      %v1759 = vld [vmem:[%s1636 + $0x109] sm:$0xff]
      %v1760 = vld [vmem:[%s1636 + $0x111] sm:$0xff]
      %v1761 = vld [vmem:[%s1636 + $0x121] sm:$0xff]
      %v1762 = vld [vmem:[%s1636 + $0x129] sm:$0xff]
      %v1763 = vld [vmem:[%s1636 + $0x139] sm:$0xff]
      %v1764 = vld [vmem:[%s1636 + $0x141] sm:$0xff]
      %v1765 = vld [vmem:[%s1636 + $0x151] sm:$0xff]
      %v1766 = vld [vmem:[%s1636 + $0x159] sm:$0xff]
      %v1767 = vld [vmem:[%s1636 + $0x169] sm:$0xff]
      %v1768 = vld [vmem:[%s1636 + $0x171] sm:$0xff]
      %v1769 = vlaneseq
      %v1770 = vshrl.u32 %v1769, 7
      %v1771 = vsub.s32 7, %v1770
      %v1772 = vrot.slane %v1066, %v1771
      %v1773 = vmul.f32 %v1737, %v1772
      %v1774 = vmul.f32 %v1738, %v1772
      %v1775 = vmul.f32 %v1739, %v1772
      %v1776 = vmul.f32 %v1740, %v1772
      %v1777 = vmul.f32 %v1741, %v1772
      %v1778 = vmul.f32 %v1742, %v1772
      %v1779 = vmul.f32 %v1743, %v1772
      %v1780 = vmul.f32 %v1744, %v1772
      %v1781 = vmul.f32 %v1745, %v1772
      %v1782 = vmul.f32 %v1746, %v1772
      %v1783 = vmul.f32 %v1747, %v1772
      %v1784 = vmul.f32 %v1748, %v1772
      %v1785 = vmul.f32 %v1749, %v1772
      %v1786 = vmul.f32 %v1750, %v1772
      %v1787 = vmul.f32 %v1751, %v1772
      %v1788 = vmul.f32 %v1752, %v1772
      %v1789 = vmul.f32 %v1753, %v1772
      %v1790 = vmul.f32 %v1754, %v1772
      %v1791 = vmul.f32 %v1755, %v1772
      %v1792 = vmul.f32 %v1756, %v1772
      %v1793 = vmul.f32 %v1757, %v1772
      %v1794 = vmul.f32 %v1758, %v1772
      %v1795 = vmul.f32 %v1759, %v1772
      %v1796 = vmul.f32 %v1760, %v1772
      %v1797 = vmul.f32 %v1761, %v1772
      %v1798 = vmul.f32 %v1762, %v1772
      %v1799 = vmul.f32 %v1763, %v1772
      %v1800 = vmul.f32 %v1764, %v1772
      %v1801 = vmul.f32 %v1765, %v1772
      %v1802 = vmul.f32 %v1766, %v1772
      %v1803 = vmul.f32 %v1767, %v1772
      %v1804 = vmul.f32 %v1768, %v1772
      %v1805 = vadd.f32 %v1705, %v1773
      %v1806 = vadd.f32 %v1706, %v1774
      %v1807 = vadd.f32 %v1707, %v1775
      %v1808 = vadd.f32 %v1708, %v1776
      %v1809 = vadd.f32 %v1709, %v1777
      %v1810 = vadd.f32 %v1710, %v1778
      %v1811 = vadd.f32 %v1711, %v1779
      %v1812 = vadd.f32 %v1712, %v1780
      %v1813 = vadd.f32 %v1713, %v1781
      %v1814 = vadd.f32 %v1714, %v1782
      %v1815 = vadd.f32 %v1715, %v1783
      %v1816 = vadd.f32 %v1716, %v1784
      %v1817 = vadd.f32 %v1717, %v1785
      %v1818 = vadd.f32 %v1718, %v1786
      %v1819 = vadd.f32 %v1719, %v1787
      %v1820 = vadd.f32 %v1720, %v1788
      %v1821 = vadd.f32 %v1721, %v1789
      %v1822 = vadd.f32 %v1722, %v1790
      %v1823 = vadd.f32 %v1723, %v1791
      %v1824 = vadd.f32 %v1724, %v1792
      %v1825 = vadd.f32 %v1725, %v1793
      %v1826 = vadd.f32 %v1726, %v1794
      %v1827 = vadd.f32 %v1727, %v1795
      %v1828 = vadd.f32 %v1728, %v1796
      %v1829 = vadd.f32 %v1729, %v1797
      %v1830 = vadd.f32 %v1730, %v1798
      %v1831 = vadd.f32 %v1731, %v1799
      %v1832 = vadd.f32 %v1732, %v1800
      %v1833 = vadd.f32 %v1733, %v1801
      %v1834 = vadd.f32 %v1734, %v1802
      %v1835 = vadd.f32 %v1735, %v1803
      %v1836 = vadd.f32 %v1736, %v1804
      %v1837 = vld [vmem:[%s1636 + $0x2] sm:$0xff]
      %v1838 = vld [vmem:[%s1636 + $0xa] sm:$0xff]
      %v1839 = vld [vmem:[%s1636 + $0x1a] sm:$0xff]
      %v1840 = vld [vmem:[%s1636 + $0x22] sm:$0xff]
      %v1841 = vld [vmem:[%s1636 + $0x32] sm:$0xff]
      %v1842 = vld [vmem:[%s1636 + $0x3a] sm:$0xff]
      %v1843 = vld [vmem:[%s1636 + $0x4a] sm:$0xff]
      %v1844 = vld [vmem:[%s1636 + $0x52] sm:$0xff]
      %v1845 = vld [vmem:[%s1636 + $0x62] sm:$0xff]
      %v1846 = vld [vmem:[%s1636 + $0x6a] sm:$0xff]
      %v1847 = vld [vmem:[%s1636 + $0x7a] sm:$0xff]
      %v1848 = vld [vmem:[%s1636 + $0x82] sm:$0xff]
      %v1849 = vld [vmem:[%s1636 + $0x92] sm:$0xff]
      %v1850 = vld [vmem:[%s1636 + $0x9a] sm:$0xff]
      %v1851 = vld [vmem:[%s1636 + $0xaa] sm:$0xff]
      %v1852 = vld [vmem:[%s1636 + $0xb2] sm:$0xff]
      %v1853 = vld [vmem:[%s1636 + $0xc2] sm:$0xff]
      %v1854 = vld [vmem:[%s1636 + $0xca] sm:$0xff]
      %v1855 = vld [vmem:[%s1636 + $0xda] sm:$0xff]
      %v1856 = vld [vmem:[%s1636 + $0xe2] sm:$0xff]
      %v1857 = vld [vmem:[%s1636 + $0xf2] sm:$0xff]
      %v1858 = vld [vmem:[%s1636 + $0xfa] sm:$0xff]
      %v1859 = vld [vmem:[%s1636 + $0x10a] sm:$0xff]
      %v1860 = vld [vmem:[%s1636 + $0x112] sm:$0xff]
      %v1861 = vld [vmem:[%s1636 + $0x122] sm:$0xff]
      %v1862 = vld [vmem:[%s1636 + $0x12a] sm:$0xff]
      %v1863 = vld [vmem:[%s1636 + $0x13a] sm:$0xff]
      %v1864 = vld [vmem:[%s1636 + $0x142] sm:$0xff]
      %v1865 = vld [vmem:[%s1636 + $0x152] sm:$0xff]
      %v1866 = vld [vmem:[%s1636 + $0x15a] sm:$0xff]
      %v1867 = vld [vmem:[%s1636 + $0x16a] sm:$0xff]
      %v1868 = vld [vmem:[%s1636 + $0x172] sm:$0xff]
      %v1869 = vlaneseq
      %v1870 = vshrl.u32 %v1869, 7
      %v1871 = vsub.s32 0, %v1870
      %v1872 = vrot.slane %v1067, %v1871
      %v1873 = vmul.f32 %v1837, %v1872
      %v1874 = vmul.f32 %v1838, %v1872
      %v1875 = vmul.f32 %v1839, %v1872
      %v1876 = vmul.f32 %v1840, %v1872
      %v1877 = vmul.f32 %v1841, %v1872
      %v1878 = vmul.f32 %v1842, %v1872
      %v1879 = vmul.f32 %v1843, %v1872
      %v1880 = vmul.f32 %v1844, %v1872
      %v1881 = vmul.f32 %v1845, %v1872
      %v1882 = vmul.f32 %v1846, %v1872
      %v1883 = vmul.f32 %v1847, %v1872
      %v1884 = vmul.f32 %v1848, %v1872
      %v1885 = vmul.f32 %v1849, %v1872
      %v1886 = vmul.f32 %v1850, %v1872
      %v1887 = vmul.f32 %v1851, %v1872
      %v1888 = vmul.f32 %v1852, %v1872
      %v1889 = vmul.f32 %v1853, %v1872
      %v1890 = vmul.f32 %v1854, %v1872
      %v1891 = vmul.f32 %v1855, %v1872
      %v1892 = vmul.f32 %v1856, %v1872
      %v1893 = vmul.f32 %v1857, %v1872
      %v1894 = vmul.f32 %v1858, %v1872
      %v1895 = vmul.f32 %v1859, %v1872
      %v1896 = vmul.f32 %v1860, %v1872
      %v1897 = vmul.f32 %v1861, %v1872
      %v1898 = vmul.f32 %v1862, %v1872
      %v1899 = vmul.f32 %v1863, %v1872
      %v1900 = vmul.f32 %v1864, %v1872
      %v1901 = vmul.f32 %v1865, %v1872
      %v1902 = vmul.f32 %v1866, %v1872
      %v1903 = vmul.f32 %v1867, %v1872
      %v1904 = vmul.f32 %v1868, %v1872
      %v1905 = vadd.f32 %v1805, %v1873
      %v1906 = vadd.f32 %v1806, %v1874
      %v1907 = vadd.f32 %v1807, %v1875
      %v1908 = vadd.f32 %v1808, %v1876
      %v1909 = vadd.f32 %v1809, %v1877
      %v1910 = vadd.f32 %v1810, %v1878
      %v1911 = vadd.f32 %v1811, %v1879
      %v1912 = vadd.f32 %v1812, %v1880
      %v1913 = vadd.f32 %v1813, %v1881
      %v1914 = vadd.f32 %v1814, %v1882
      %v1915 = vadd.f32 %v1815, %v1883
      %v1916 = vadd.f32 %v1816, %v1884
      %v1917 = vadd.f32 %v1817, %v1885
      %v1918 = vadd.f32 %v1818, %v1886
      %v1919 = vadd.f32 %v1819, %v1887
      %v1920 = vadd.f32 %v1820, %v1888
      %v1921 = vadd.f32 %v1821, %v1889
      %v1922 = vadd.f32 %v1822, %v1890
      %v1923 = vadd.f32 %v1823, %v1891
      %v1924 = vadd.f32 %v1824, %v1892
      %v1925 = vadd.f32 %v1825, %v1893
      %v1926 = vadd.f32 %v1826, %v1894
      %v1927 = vadd.f32 %v1827, %v1895
      %v1928 = vadd.f32 %v1828, %v1896
      %v1929 = vadd.f32 %v1829, %v1897
      %v1930 = vadd.f32 %v1830, %v1898
      %v1931 = vadd.f32 %v1831, %v1899
      %v1932 = vadd.f32 %v1832, %v1900
      %v1933 = vadd.f32 %v1833, %v1901
      %v1934 = vadd.f32 %v1834, %v1902
      %v1935 = vadd.f32 %v1835, %v1903
      %v1936 = vadd.f32 %v1836, %v1904
      %v1937 = vld [vmem:[%s6] sm:$0x1]
      %v1939 = vlaneseq
      %v1940 = vshrl.u32 %v1939, 7
      %v1941 = vsub.s32 0, %v1940
      %v1942 = vrot.slane %v1937, %v1941
      %v1944 = vadd.f32 %v1905, %v1942
      %v1945 = vadd.f32 %v1906, %v1942
      %v1946 = vadd.f32 %v1907, %v1942
      %v1947 = vadd.f32 %v1908, %v1942
      %v1948 = vadd.f32 %v1909, %v1942
      %v1949 = vadd.f32 %v1910, %v1942
      %v1950 = vadd.f32 %v1911, %v1942
      %v1951 = vadd.f32 %v1912, %v1942
      %v1952 = vadd.f32 %v1913, %v1942
      %v1953 = vadd.f32 %v1914, %v1942
      %v1954 = vadd.f32 %v1915, %v1942
      %v1955 = vadd.f32 %v1916, %v1942
      %v1956 = vadd.f32 %v1917, %v1942
      %v1957 = vadd.f32 %v1918, %v1942
      %v1958 = vadd.f32 %v1919, %v1942
      %v1959 = vadd.f32 %v1920, %v1942
      %v1960 = vadd.f32 %v1921, %v1942
      %v1961 = vadd.f32 %v1922, %v1942
      %v1962 = vadd.f32 %v1923, %v1942
      %v1963 = vadd.f32 %v1924, %v1942
      %v1964 = vadd.f32 %v1925, %v1942
      %v1965 = vadd.f32 %v1926, %v1942
      %v1966 = vadd.f32 %v1927, %v1942
      %v1967 = vadd.f32 %v1928, %v1942
      %v1968 = vadd.f32 %v1929, %v1942
      %v1969 = vadd.f32 %v1930, %v1942
      %v1970 = vadd.f32 %v1931, %v1942
      %v1971 = vadd.f32 %v1932, %v1942
      %v1972 = vadd.f32 %v1933, %v1942
      %v1973 = vadd.f32 %v1934, %v1942
      %v1974 = vadd.f32 %v1935, %v1942
      %v1975 = vadd.f32 %v1936, %v1942
      %v1976 = vmax.f32 %v1944, 0.0
      %v1977 = vmax.f32 %v1945, 0.0
      %v1978 = vmax.f32 %v1946, 0.0
      %v1979 = vmax.f32 %v1947, 0.0
      %v1980 = vmax.f32 %v1948, 0.0
      %v1981 = vmax.f32 %v1949, 0.0
      %v1982 = vmax.f32 %v1950, 0.0
      %v1983 = vmax.f32 %v1951, 0.0
      %v1984 = vmax.f32 %v1952, 0.0
      %v1985 = vmax.f32 %v1953, 0.0
      %v1986 = vmax.f32 %v1954, 0.0
      %v1987 = vmax.f32 %v1955, 0.0
      %v1988 = vmax.f32 %v1956, 0.0
      %v1989 = vmax.f32 %v1957, 0.0
      %v1990 = vmax.f32 %v1958, 0.0
      %v1991 = vmax.f32 %v1959, 0.0
      %v1992 = vmax.f32 %v1960, 0.0
      %v1993 = vmax.f32 %v1961, 0.0
      %v1994 = vmax.f32 %v1962, 0.0
      %v1995 = vmax.f32 %v1963, 0.0
      %v1996 = vmax.f32 %v1964, 0.0
      %v1997 = vmax.f32 %v1965, 0.0
      %v1998 = vmax.f32 %v1966, 0.0
      %v1999 = vmax.f32 %v1967, 0.0
      %v2000 = vmax.f32 %v1968, 0.0
      %v2001 = vmax.f32 %v1969, 0.0
      %v2002 = vmax.f32 %v1970, 0.0
      %v2003 = vmax.f32 %v1971, 0.0
      %v2004 = vmax.f32 %v1972, 0.0
      %v2005 = vmax.f32 %v1973, 0.0
      %v2006 = vmax.f32 %v1974, 0.0
      %v2007 = vmax.f32 %v1975, 0.0
      %v2008 = vmin.f32 %v1976, 6.0
      %v2009 = vmin.f32 %v1977, 6.0
      %v2010 = vmin.f32 %v1978, 6.0
      %v2011 = vmin.f32 %v1979, 6.0
      %v2012 = vmin.f32 %v1980, 6.0
      %v2013 = vmin.f32 %v1981, 6.0
      %v2014 = vmin.f32 %v1982, 6.0
      %v2015 = vmin.f32 %v1983, 6.0
      %v2016 = vmin.f32 %v1984, 6.0
      %v2017 = vmin.f32 %v1985, 6.0
      %v2018 = vmin.f32 %v1986, 6.0
      %v2019 = vmin.f32 %v1987, 6.0
      %v2020 = vmin.f32 %v1988, 6.0
      %v2021 = vmin.f32 %v1989, 6.0
      %v2022 = vmin.f32 %v1990, 6.0
      %v2023 = vmin.f32 %v1991, 6.0
      %v2024 = vmin.f32 %v1992, 6.0
      %v2025 = vmin.f32 %v1993, 6.0
      %v2026 = vmin.f32 %v1994, 6.0
      %v2027 = vmin.f32 %v1995, 6.0
      %v2028 = vmin.f32 %v1996, 6.0
      %v2029 = vmin.f32 %v1997, 6.0
      %v2030 = vmin.f32 %v1998, 6.0
      %v2031 = vmin.f32 %v1999, 6.0
      %v2032 = vmin.f32 %v2000, 6.0
      %v2033 = vmin.f32 %v2001, 6.0
      %v2034 = vmin.f32 %v2002, 6.0
      %v2035 = vmin.f32 %v2003, 6.0
      %v2036 = vmin.f32 %v2004, 6.0
      %v2037 = vmin.f32 %v2005, 6.0
      %v2038 = vmin.f32 %v2006, 6.0
      %v2039 = vmin.f32 %v2007, 6.0
      %v2040 = vld [vmem:[%s7] sm:$0xff]
      %v2041 = vld [vmem:[%s7 + $0x8] sm:$0xff]
      %v2042 = vld [vmem:[%s7 + $0x10] sm:$0xff]
      %v2043 = vld [vmem:[%s7 + $0x18] sm:$0xff]
      %v2044 = vld [vmem:[%s8] sm:$0x1]
      %v2046 = vlaneseq
      %v2047 = vshrl.u32 %v2046, 7
      %v2048 = vsub.s32 0, %v2047
      %v2049 = vrot.slane %v2044, %v2048
      %v2052 = vsel %vm872, %v2008, 0
      %v2055 = vsel %vm872, %v2009, 0
      %v2058 = vsel %vm872, %v2010, 0
      %v2061 = vsel %vm872, %v2011, 0
      %v2064 = vsel %vm872, %v2012, 0
      %v2067 = vsel %vm872, %v2013, 0
      %v2070 = vsel %vm872, %v2014, 0
      %v2073 = vsel %vm872, %v2015, 0
      %v2076 = vsel %vm872, %v2016, 0
      %v2079 = vsel %vm872, %v2017, 0
      %v2082 = vsel %vm872, %v2018, 0
      %v2085 = vsel %vm872, %v2019, 0
      %v2088 = vsel %vm872, %v2020, 0
      %v2091 = vsel %vm872, %v2021, 0
      %v2094 = vsel %vm872, %v2022, 0
      %v2097 = vsel %vm872, %v2023, 0
      %v2100 = vsel %vm872, %v2024, 0
      %v2103 = vsel %vm872, %v2025, 0
      %v2106 = vsel %vm872, %v2026, 0
      %v2109 = vsel %vm872, %v2027, 0
      %v2112 = vsel %vm872, %v2028, 0
      %v2115 = vsel %vm872, %v2029, 0
      %v2118 = vsel %vm872, %v2030, 0
      %v2121 = vsel %vm872, %v2031, 0
      %v2124 = vsel %vm872, %v2032, 0
      %v2127 = vsel %vm872, %v2033, 0
      %v2130 = vsel %vm872, %v2034, 0
      %v2133 = vsel %vm872, %v2035, 0
      %v2136 = vsel %vm872, %v2036, 0
      %v2139 = vsel %vm872, %v2037, 0
      %v2142 = vsel %vm872, %v2038, 0
      %v2145 = vsel %vm872, %v2039, 0
      %2147 = vmatprep.subr.mxu0 0.0
      %2148 = vmatpush1.msra.mxu0 %v2040
      %2149 = vmatprep.subr.mxu0 0.0
      %2150 = vmatpush1.msra.mxu0 %v2041
      %2151 = vmatprep.subr.mxu0 0.0
      %2152 = vmatpush1.msra.mxu0 %v2042
      %2153 = vmatprep.subr.mxu0 0.0
      %2154 = vmatpush1.msra.mxu0 %v2043
      %2155 = vmatprep.subr.mxu0 0.0
      %2156 = vmatpush1.msra.mxu0 0.0
      %2157 = vmatprep.subr.mxu0 0.0
      %2158 = vmatpush1.msra.mxu0 0.0
      %2159 = vmatprep.subr.mxu0 0.0
      %2160 = vmatpush1.msra.mxu0 0.0
      %2161 = vmatprep.subr.mxu0 0.0
      %2162 = vmatpush1.msra.mxu0 0.0
      %2163 = vmatprep.subr.mxu0 0.0
      %2164 = vmatpush1.msra.mxu0 0.0
      %2165 = vmatprep.subr.mxu0 0.0
      %2166 = vmatpush1.msra.mxu0 0.0
      %2167 = vmatprep.subr.mxu0 0.0
      %2168 = vmatpush1.msra.mxu0 0.0
      %2169 = vmatprep.subr.mxu0 0.0
      %2170 = vmatpush1.msra.mxu0 0.0
      %2171 = vmatprep.subr.mxu0 0.0
      %2172 = vmatpush1.msra.mxu0 0.0
      %2173 = vmatprep.subr.mxu0 0.0
      %2174 = vmatpush1.msra.mxu0 0.0
      %2175 = vmatprep.subr.mxu0 0.0
      %2176 = vmatpush1.msra.mxu0 0.0
      %2177 = vmatprep.subr.mxu0 0.0
      %2178 = vmatpush1.msra.mxu0 0.0
      %2179 = vmatprep.subr.mxu0 0.0
      %2180 = vmatpush1.msra.mxu0 0.0
      %2181 = vmatprep.subr.mxu0 0.0
      %2182 = vmatpush1.msra.mxu0 0.0
      %2183 = vmatprep.subr.mxu0 0.0
      %2184 = vmatpush1.msra.mxu0 0.0
      %2185 = vmatprep.subr.mxu0 0.0
      %2186 = vmatpush1.msra.mxu0 0.0
      %2187 = vmatprep.subr.mxu0 0.0
      %2188 = vmatpush1.msra.mxu0 0.0
      %2189 = vmatprep.subr.mxu0 0.0
      %2190 = vmatpush1.msra.mxu0 0.0
      %2191 = vmatprep.subr.mxu0 0.0
      %2192 = vmatpush1.msra.mxu0 0.0
      %2193 = vmatprep.subr.mxu0 0.0
      %2194 = vmatpush1.msra.mxu0 0.0
      %2195 = vmatprep.subr.mxu0 0.0
      %2196 = vmatpush1.msra.mxu0 0.0
      %2197 = vmatprep.subr.mxu0 0.0
      %2198 = vmatpush1.msra.mxu0 0.0
      %2199 = vmatprep.subr.mxu0 0.0
      %2200 = vmatpush1.msra.mxu0 0.0
      %2201 = vmatprep.subr.mxu0 0.0
      %2202 = vmatpush1.msra.mxu0 0.0
      %2203 = vmatprep.subr.mxu0 0.0
      %2204 = vmatpush1.msra.mxu0 0.0
      %2205 = vmatprep.subr.mxu0 0.0
      %2206 = vmatpush1.msra.mxu0 0.0
      %2207 = vmatprep.subr.mxu0 0.0
      %2208 = vmatpush1.msra.mxu0 0.0
      %2209 = vmatprep.subr.mxu0 0.0
      %2210 = vmatpush1.msra.mxu0 0.0
      %2211 = vmatprep.mubr.f32.mxu0 0.0
      %2212 = vmatmul.mubr.f32.gmra.mrb[0].mxu0 %v2052
      %v2213 = vpop.f32.mrb[0].mxu0
      %v2214 = vadd.f32 %v2049, %v2213
      %v2215 = vpop.f32.mrb[0].mxu0
      %2216 = vmatprep.mubr.f32.mxu0 0.0
      %2217 = vmatmul.mubr.f32.gmra.mrb[0].mxu0 %v2055
      %v2218 = vpop.f32.mrb[0].mxu0
      %v2219 = vadd.f32 %v2049, %v2218
      %v2220 = vpop.f32.mrb[0].mxu0
      %2221 = vmatprep.mubr.f32.mxu0 0.0
      %2222 = vmatmul.mubr.f32.gmra.mrb[0].mxu0 %v2058
      %v2223 = vpop.f32.mrb[0].mxu0
      %v2224 = vadd.f32 %v2049, %v2223
      %v2225 = vpop.f32.mrb[0].mxu0
      %2226 = vmatprep.mubr.f32.mxu0 0.0
      %2227 = vmatmul.mubr.f32.gmra.mrb[0].mxu0 %v2061
      %v2228 = vpop.f32.mrb[0].mxu0
      %v2229 = vadd.f32 %v2049, %v2228
      %v2230 = vpop.f32.mrb[0].mxu0
      %2231 = vmatprep.mubr.f32.mxu0 0.0
      %2232 = vmatmul.mubr.f32.gmra.mrb[0].mxu0 %v2064
      %v2233 = vpop.f32.mrb[0].mxu0
      %v2234 = vadd.f32 %v2049, %v2233
      %v2235 = vpop.f32.mrb[0].mxu0
      %2236 = vmatprep.mubr.f32.mxu0 0.0
      %2237 = vmatmul.mubr.f32.gmra.mrb[0].mxu0 %v2067
      %v2238 = vpop.f32.mrb[0].mxu0
      %v2239 = vadd.f32 %v2049, %v2238
      %v2240 = vpop.f32.mrb[0].mxu0
      %2241 = vmatprep.mubr.f32.mxu0 0.0
      %2242 = vmatmul.mubr.f32.gmra.mrb[0].mxu0 %v2070
      %v2243 = vpop.f32.mrb[0].mxu0
      %v2244 = vadd.f32 %v2049, %v2243
      %v2245 = vpop.f32.mrb[0].mxu0
      %2246 = vmatprep.mubr.f32.mxu0 0.0
      %2247 = vmatmul.mubr.f32.gmra.mrb[0].mxu0 %v2073
      %v2248 = vpop.f32.mrb[0].mxu0
      %v2249 = vadd.f32 %v2049, %v2248
      %v2250 = vpop.f32.mrb[0].mxu0
      %2251 = vmatprep.mubr.f32.mxu0 0.0
      %2252 = vmatmul.mubr.f32.gmra.mrb[0].mxu0 %v2076
      %v2253 = vpop.f32.mrb[0].mxu0
      %v2254 = vadd.f32 %v2049, %v2253
      %v2255 = vpop.f32.mrb[0].mxu0
      %2256 = vmatprep.mubr.f32.mxu0 0.0
      %2257 = vmatmul.mubr.f32.gmra.mrb[0].mxu0 %v2079
      %v2258 = vpop.f32.mrb[0].mxu0
      %v2259 = vadd.f32 %v2049, %v2258
      %v2260 = vpop.f32.mrb[0].mxu0
      %2261 = vmatprep.mubr.f32.mxu0 0.0
      %2262 = vmatmul.mubr.f32.gmra.mrb[0].mxu0 %v2082
      %v2263 = vpop.f32.mrb[0].mxu0
      %v2264 = vadd.f32 %v2049, %v2263
      %v2265 = vpop.f32.mrb[0].mxu0
      %2266 = vmatprep.mubr.f32.mxu0 0.0
      %2267 = vmatmul.mubr.f32.gmra.mrb[0].mxu0 %v2085
      %v2268 = vpop.f32.mrb[0].mxu0
      %v2269 = vadd.f32 %v2049, %v2268
      %v2270 = vpop.f32.mrb[0].mxu0
      %2271 = vmatprep.mubr.f32.mxu0 0.0
      %2272 = vmatmul.mubr.f32.gmra.mrb[0].mxu0 %v2088
      %v2273 = vpop.f32.mrb[0].mxu0
      %v2274 = vadd.f32 %v2049, %v2273
      %v2275 = vpop.f32.mrb[0].mxu0
      %2276 = vmatprep.mubr.f32.mxu0 0.0
      %2277 = vmatmul.mubr.f32.gmra.mrb[0].mxu0 %v2091
      %v2278 = vpop.f32.mrb[0].mxu0
      %v2279 = vadd.f32 %v2049, %v2278
      %v2280 = vpop.f32.mrb[0].mxu0
      %2281 = vmatprep.mubr.f32.mxu0 0.0
      %2282 = vmatmul.mubr.f32.gmra.mrb[0].mxu0 %v2094
      %v2283 = vpop.f32.mrb[0].mxu0
      %v2284 = vadd.f32 %v2049, %v2283
      %v2285 = vpop.f32.mrb[0].mxu0
      %2286 = vmatprep.mubr.f32.mxu0 0.0
      %2287 = vmatmul.mubr.f32.gmra.mrb[0].mxu0 %v2097
      %v2288 = vpop.f32.mrb[0].mxu0
      %v2289 = vadd.f32 %v2049, %v2288
      %v2290 = vpop.f32.mrb[0].mxu0
      %2291 = vmatprep.mubr.f32.mxu0 0.0
      %2292 = vmatmul.mubr.f32.gmra.mrb[0].mxu0 %v2100
      %v2293 = vpop.f32.mrb[0].mxu0
      %v2294 = vadd.f32 %v2049, %v2293
      %v2295 = vpop.f32.mrb[0].mxu0
      %2296 = vmatprep.mubr.f32.mxu0 0.0
      %2297 = vmatmul.mubr.f32.gmra.mrb[0].mxu0 %v2103
      %v2298 = vpop.f32.mrb[0].mxu0
      %v2299 = vadd.f32 %v2049, %v2298
      %v2300 = vpop.f32.mrb[0].mxu0
      %2301 = vmatprep.mubr.f32.mxu0 0.0
      %2302 = vmatmul.mubr.f32.gmra.mrb[0].mxu0 %v2106
      %v2303 = vpop.f32.mrb[0].mxu0
      %v2304 = vadd.f32 %v2049, %v2303
      %v2305 = vpop.f32.mrb[0].mxu0
      %2306 = vmatprep.mubr.f32.mxu0 0.0
      %2307 = vmatmul.mubr.f32.gmra.mrb[0].mxu0 %v2109
      %v2308 = vpop.f32.mrb[0].mxu0
      %v2309 = vadd.f32 %v2049, %v2308
      %v2310 = vpop.f32.mrb[0].mxu0
      %2311 = vmatprep.mubr.f32.mxu0 0.0
      %2312 = vmatmul.mubr.f32.gmra.mrb[0].mxu0 %v2112
      %v2313 = vpop.f32.mrb[0].mxu0
      %v2314 = vadd.f32 %v2049, %v2313
      %v2315 = vpop.f32.mrb[0].mxu0
      %2316 = vmatprep.mubr.f32.mxu0 0.0
      %2317 = vmatmul.mubr.f32.gmra.mrb[0].mxu0 %v2115
      %v2318 = vpop.f32.mrb[0].mxu0
      %v2319 = vadd.f32 %v2049, %v2318
      %v2320 = vpop.f32.mrb[0].mxu0
      %2321 = vmatprep.mubr.f32.mxu0 0.0
      %2322 = vmatmul.mubr.f32.gmra.mrb[0].mxu0 %v2118
      %v2323 = vpop.f32.mrb[0].mxu0
      %v2324 = vadd.f32 %v2049, %v2323
      %v2325 = vpop.f32.mrb[0].mxu0
      %2326 = vmatprep.mubr.f32.mxu0 0.0
      %2327 = vmatmul.mubr.f32.gmra.mrb[0].mxu0 %v2121
      %v2328 = vpop.f32.mrb[0].mxu0
      %v2329 = vadd.f32 %v2049, %v2328
      %v2330 = vpop.f32.mrb[0].mxu0
      %2331 = vmatprep.mubr.f32.mxu0 0.0
      %2332 = vmatmul.mubr.f32.gmra.mrb[0].mxu0 %v2124
      %v2333 = vpop.f32.mrb[0].mxu0
      %v2334 = vadd.f32 %v2049, %v2333
      %v2335 = vpop.f32.mrb[0].mxu0
      %2336 = vmatprep.mubr.f32.mxu0 0.0
      %2337 = vmatmul.mubr.f32.gmra.mrb[0].mxu0 %v2127
      %v2338 = vpop.f32.mrb[0].mxu0
      %v2339 = vadd.f32 %v2049, %v2338
      %v2340 = vpop.f32.mrb[0].mxu0
      %2341 = vmatprep.mubr.f32.mxu0 0.0
      %2342 = vmatmul.mubr.f32.gmra.mrb[0].mxu0 %v2130
      %v2343 = vpop.f32.mrb[0].mxu0
      %v2344 = vadd.f32 %v2049, %v2343
      %v2345 = vpop.f32.mrb[0].mxu0
      %2346 = vmatprep.mubr.f32.mxu0 0.0
      %2347 = vmatmul.mubr.f32.gmra.mrb[0].mxu0 %v2133
      %v2348 = vpop.f32.mrb[0].mxu0
      %v2349 = vadd.f32 %v2049, %v2348
      %v2350 = vpop.f32.mrb[0].mxu0
      %2351 = vmatprep.mubr.f32.mxu0 0.0
      %2352 = vmatmul.mubr.f32.gmra.mrb[0].mxu0 %v2136
      %v2353 = vpop.f32.mrb[0].mxu0
      %v2354 = vadd.f32 %v2049, %v2353
      %v2355 = vpop.f32.mrb[0].mxu0
      %2356 = vmatprep.mubr.f32.mxu0 0.0
      %2357 = vmatmul.mubr.f32.gmra.mrb[0].mxu0 %v2139
      %v2358 = vpop.f32.mrb[0].mxu0
      %v2359 = vadd.f32 %v2049, %v2358
      %v2360 = vpop.f32.mrb[0].mxu0
      %2361 = vmatprep.mubr.f32.mxu0 0.0
      %2362 = vmatmul.mubr.f32.gmra.mrb[0].mxu0 %v2142
      %v2363 = vpop.f32.mrb[0].mxu0
      %v2364 = vadd.f32 %v2049, %v2363
      %v2365 = vpop.f32.mrb[0].mxu0
      %2366 = vmatprep.mubr.f32.mxu0 0.0
      %2367 = vmatmul.mubr.f32.gmra.mrb[0].mxu0 %v2145
      %v2368 = vpop.f32.mrb[0].mxu0
      %v2369 = vadd.f32 %v2049, %v2368
      %v2370 = vpop.f32.mrb[0].mxu0
      %2371 = vdwg.mxu0
      %2372 = vst.msk [vmem:[%s443] sm:$0xff] %vm485, %v2214
      %2373 = vst.msk [vmem:[%s443 + $0x8] sm:$0xff] %vm485, %v2219
      %2374 = vst.msk [vmem:[%s443 + $0x10] sm:$0xff] %vm485, %v2224
      %2375 = vst.msk [vmem:[%s443 + $0x18] sm:$0xff] %vm485, %v2229
      %2376 = vst.msk [vmem:[%s443 + $0x20] sm:$0xff] %vm485, %v2234
      %2377 = vst.msk [vmem:[%s443 + $0x28] sm:$0xff] %vm485, %v2239
      %2378 = vst.msk [vmem:[%s443 + $0x30] sm:$0xff] %vm485, %v2244
      %2379 = vst.msk [vmem:[%s443 + $0x38] sm:$0xff] %vm485, %v2249
      %2380 = vst.msk [vmem:[%s443 + $0x40] sm:$0xff] %vm485, %v2254
      %2381 = vst.msk [vmem:[%s443 + $0x48] sm:$0xff] %vm485, %v2259
      %2382 = vst.msk [vmem:[%s443 + $0x50] sm:$0xff] %vm485, %v2264
      %2383 = vst.msk [vmem:[%s443 + $0x58] sm:$0xff] %vm485, %v2269
      %2384 = vst.msk [vmem:[%s443 + $0x60] sm:$0xff] %vm485, %v2274
      %2385 = vst.msk [vmem:[%s443 + $0x68] sm:$0xff] %vm485, %v2279
      %2386 = vst.msk [vmem:[%s443 + $0x70] sm:$0xff] %vm485, %v2284
      %2387 = vst.msk [vmem:[%s443 + $0x78] sm:$0xff] %vm485, %v2289
      %2388 = vst.msk [vmem:[%s443 + $0x80] sm:$0xff] %vm485, %v2294
      %2389 = vst.msk [vmem:[%s443 + $0x88] sm:$0xff] %vm485, %v2299
      %2390 = vst.msk [vmem:[%s443 + $0x90] sm:$0xff] %vm485, %v2304
      %2391 = vst.msk [vmem:[%s443 + $0x98] sm:$0xff] %vm485, %v2309
      %2392 = vst.msk [vmem:[%s443 + $0xa0] sm:$0xff] %vm485, %v2314
      %2393 = vst.msk [vmem:[%s443 + $0xa8] sm:$0xff] %vm485, %v2319
      %2394 = vst.msk [vmem:[%s443 + $0xb0] sm:$0xff] %vm485, %v2324
      %2395 = vst.msk [vmem:[%s443 + $0xb8] sm:$0xff] %vm485, %v2329
      %2396 = vst.msk [vmem:[%s443 + $0xc0] sm:$0xff] %vm485, %v2334
      %2397 = vst.msk [vmem:[%s443 + $0xc8] sm:$0xff] %vm485, %v2339
      %2398 = vst.msk [vmem:[%s443 + $0xd0] sm:$0xff] %vm485, %v2344
      %2399 = vst.msk [vmem:[%s443 + $0xd8] sm:$0xff] %vm485, %v2349
      %2400 = vst.msk [vmem:[%s443 + $0xe0] sm:$0xff] %vm485, %v2354
      %2401 = vst.msk [vmem:[%s443 + $0xe8] sm:$0xff] %vm485, %v2359
      %2402 = vst.msk [vmem:[%s443 + $0xf0] sm:$0xff] %vm485, %v2364
      %2403 = vst.msk [vmem:[%s443 + $0xf8] sm:$0xff] %vm485, %v2369
      %s2404 = smul.u32 16, %s25
      %p2405 = scmp.lt.s32.totalorder %s24, 1
      %s2406 = scalar_select %p2405, %s24, 1
      %p2407 = scmp.lt.s32.totalorder %s2404, 15
      %s2408 = scalar_select %p2407, %s2404, 15
      %s2409 = smul.addr %s2408, 2
      %s2410 = smul.addr %s2406, 32
      %s2411 = sadd.s32 %s2409, %s2410
      %s2412 = smul.addr %s2411, 8
      %s2413 = scalar_lea.vmem %s9, %s2412
      // Predicated region
      $region57: #{tpu_custom_call.1} parent=55 // pred_check
        %p2414 = pneg %p262
      $region58: #{tpu_custom_call.1} parent=55 // pred_check_branch
        %2416 = sbr.rel (%p2414) target = $region60
      $region59: #{tpu_custom_call.1} parent=55 // pred_region
        %s2417 = smul.u32 16, %s25
      $region60: #{tpu_custom_call.1} parent=55 // pred_fallthru
        _
    $region56: #{tpu_custom_call.1} parent=5 // pred_fallthru
      _
    %p2418 = scmp.le.s32.totalorder 2, %s15
    // Predicated region
    $region61: #{tpu_custom_call.1} parent=5 // pred_check
      %p2419 = pneg %p2418
    $region62: #{tpu_custom_call.1} parent=5 // pred_check_branch
      %2421 = sbr.rel (%p2419) target = $region64
    $region63: #{tpu_custom_call.1} parent=5 // pred_region
      %s2422 = ssub.s32 %s15, 2
      // Predicated region
      $region65: #{tpu_custom_call.1} parent=63 // pred_check
        %p2423 = pneg %p268
      $region66: #{tpu_custom_call.1} parent=63 // pred_check_branch
        %2425 = sbr.rel (%p2423) target = $region68
      $region67: #{tpu_custom_call.1} parent=63 // pred_region
        %s2426 = smul.u32 16, %s27
        %p2427 = scmp.lt.s32.totalorder %s26, 1
        %s2428 = scalar_select %p2427, %s26, 1
        %p2429 = scmp.lt.s32.totalorder %s2426, 15
        %s2430 = scalar_select %p2429, %s2426, 15
        %s2431 = smul.addr %s2430, 2
        %s2432 = smul.addr %s2428, 32
        %s2433 = sadd.s32 %s2431, %s2432
        %s2434 = smul.addr %s2433, 8
        %s2435 = scalar_lea.vmem %s9, %s2434
      $region68: #{tpu_custom_call.1} parent=63 // pred_fallthru
        _
    $region64: #{tpu_custom_call.1} parent=5 // pred_fallthru
      _
  $region6: #{tpu_custom_call.1} parent=0 // loop_footer
    %s19 = sadd.s32 1, %s15
  $region7: #{tpu_custom_call.1} parent=0 // loop_footer_branch
    %14 = sbr.rel target = $region3
  $region8: #{tpu_custom_call.1} parent=0 // loop_exit
    _

</llo_original>
